<compile_context>
chip_gen: v7x
topology: tpu7x:2x2x1
jax: 0.10.0
libtpu: 0.0.40
codegen_flags: <defaults>
</compile_context>

<pallas_src>
import functools

import jax
import jax.numpy as jnp
from jax.experimental import pallas as pl
from jax.experimental.pallas import tpu as pltpu


_H = 128          # per-head hidden width
_HF = 2 * _H      # fused hidden width (both heads stacked along sublanes)
_OUT_ROWS = 8     # padded output rows: row 0 = potential, rows 1:3 = gradient


def _round_up(n, m):
    return ((n + m - 1) // m) * m


def _fused_mlp_kernel(xT_ref,
                      w1t_ref, b1_ref,
                      w2t_ref, b2_ref,
                      w3t_ref, b3_ref,
                      w4t_ref, b4_ref,
                      out_ref, *, fuse_mid, mm_dtype):
    """Both heads for one batch tile; activations kept as (features, batch)."""
    xT = xT_ref[...]                       # (2, TB) f32
    w1 = w1t_ref[...]                      # (2H, 2) f32

    # fc1 / fc5: K == 2 -> two VPU broadcast-FMAs beat an almost-empty MXU pass.
    h = w1[:, 0:1] * xT[0:1, :] + w1[:, 1:2] * xT[1:2, :] + b1_ref[...]
    h = jnp.tanh(h)                        # (2H, TB) f32

    if fuse_mid:
        # v6e / v7x: one block-diagonal 256-wide pass fills the 256x256 MXU.
        # Weights are stored in mm_dtype (bf16 by default); accumulate in f32.
        def mid(w_ref, b_ref, h):
            z = jnp.dot(w_ref[...], h.astype(mm_dtype),
                        preferred_element_type=jnp.float32)
            return jnp.tanh(z + b_ref[...])

        h = mid(w2t_ref, b2_ref, h)        # fc2 / fc6
        h = mid(w3t_ref, b3_ref, h)        # fc3 / fc7

        # fc4 / fc8 packed into one (8, 2H) matrix (rows 3..7 are zero padding).
        out = jnp.dot(w4t_ref[...], h.astype(mm_dtype),
                      preferred_element_type=jnp.float32) + b4_ref[...]
    else:
        # v5-class: 128-wide MXU.  Carry the two head activations as separate
        # (H, TB) halves (no concatenate copies); relies on the off-diagonal
        # blocks of w2t/w3t being exactly zero (guaranteed by _pack_params).
        hp = h[0:_H, :]
        hg = h[_H:_HF, :]

        def mid_half(w_ref, b_ref, hp, hg):
            zp = jnp.dot(w_ref[0:_H, 0:_H], hp.astype(mm_dtype),
                         preferred_element_type=jnp.float32)
            zg = jnp.dot(w_ref[_H:_HF, _H:_HF], hg.astype(mm_dtype),
                         preferred_element_type=jnp.float32)
            return (jnp.tanh(zp + b_ref[0:_H, :]),
                    jnp.tanh(zg + b_ref[_H:_HF, :]))

        hp, hg = mid_half(w2t_ref, b2_ref, hp, hg)   # fc2 / fc6
        hp, hg = mid_half(w3t_ref, b3_ref, hp, hg)   # fc3 / fc7

        out = (jnp.dot(w4t_ref[:, 0:_H], hp.astype(mm_dtype),
                       preferred_element_type=jnp.float32)
               + jnp.dot(w4t_ref[:, _H:_HF], hg.astype(mm_dtype),
                         preferred_element_type=jnp.float32)
               + b4_ref[...])

    out_ref[...] = out.astype(out_ref.dtype)


def _default_fuse_mid():
    """Use 256-wide block-diagonal middle layers only on 256-wide-MXU chips."""
    try:
        kind = jax.devices()[0].device_kind.lower()
    except Exception:
        return True
    return not any(v in kind for v in ("v2", "v3", "v4", "v5"))


def _pack_params(params, *, mm_dtype):
    """Pack the 8 (W, b) pairs into fused, transposed arrays.

    Matmul weights (w2t/w3t/w4t) are stored in mm_dtype (bf16 by default) so
    the MXU runs in its native precision; biases and the first-layer (VPU)
    weight stay f32; all accumulation is f32.
    """
    w1, b1 = params["fc1"]; w5, b5 = params["fc5"]
    w2, b2 = params["fc2"]; w6, b6 = params["fc6"]
    w3, b3 = params["fc3"]; w7, b7 = params["fc7"]
    w4, b4 = params["fc4"]; w8, b8 = params["fc8"]
    f32 = jnp.float32

    # First layer: (2H, 2) = [fc1^T ; fc5^T]
    w1t = jnp.concatenate([w1.T, w5.T], axis=0).astype(f32)              # (256, 2)
    b1f = jnp.concatenate([b1, b5], axis=0).reshape(_HF, 1).astype(f32)  # (256, 1)

    def blockdiag_t(wa, wb):
        # Off-diagonal blocks MUST stay exactly zero: the split (fuse_mid=False)
        # kernel path assumes it.
        z = jnp.zeros((_H, _H), f32)
        top = jnp.concatenate([wa.T.astype(f32), z], axis=1)
        bot = jnp.concatenate([z, wb.T.astype(f32)], axis=1)
        return jnp.concatenate([top, bot], axis=0).astype(mm_dtype)      # (256, 256)

    w2t = blockdiag_t(w2, w6)
    b2f = jnp.concatenate([b2, b6], axis=0).reshape(_HF, 1).astype(f32)
    w3t = blockdiag_t(w3, w7)
    b3f = jnp.concatenate([b3, b7], axis=0).reshape(_HF, 1).astype(f32)

    # Last layer: (8, 2H); row 0 -> potential, rows 1:3 -> gradient, rest zero.
    w4t = jnp.zeros((_OUT_ROWS, _HF), f32)
    w4t = w4t.at[0:1, 0:_H].set(w4.T.astype(f32))     # (1, 128)
    w4t = w4t.at[1:3, _H:_HF].set(w8.T.astype(f32))   # (2, 128)
    w4t = w4t.astype(mm_dtype)
    b4f = jnp.zeros((_OUT_ROWS, 1), f32)
    b4f = b4f.at[0, 0].set(b4[0])
    b4f = b4f.at[1, 0].set(b8[0])
    b4f = b4f.at[2, 0].set(b8[1])

    return (w1t, b1f, w2t, b2f, w3t, b3f, w4t, b4f)


def potential_gradient_forward(x, params, *, tile_b=4096, fuse_mid=None,
                               use_bf16=True):
    """x: (B, 2) float32. Returns (potential (B,1), gradient (B,2)), float32."""
    B, F = x.shape
    assert F == 2

    if fuse_mid is None:
        fuse_mid = _default_fuse_mid()
    mm_dtype = jnp.bfloat16 if use_bf16 else jnp.float32

    # Batch tile: multiple of the 128-wide lane axis.
    tile_b = max(128, (int(tile_b) // 128) * 128)
    b_ceil = _round_up(B, 128)
    # Keep the grid >= 2 steps whenever the batch allows it, so the "parallel"
    # batch axis can shard across both TensorCores on v7x (megacore elsewhere).
    half = max(128, _round_up((b_ceil + 1) // 2, 128))
    tile_b = min(tile_b, half if b_ceil >= 256 else b_ceil)
    b_pad = _round_up(b_ceil, tile_b)

    # Transposed, zero-padded input: batch on the lane axis.
    xT = jnp.zeros((F, b_pad), jnp.float32).at[:, :B].set(x.T.astype(jnp.float32))

    flat = _pack_params(params, mm_dtype=mm_dtype)
    grid = (b_pad // tile_b,)

    def full_spec(arr):
        # Constant index_map: weight/bias tiles are DMA'd once and stay resident.
        return pl.BlockSpec(arr.shape, lambda i, nd=arr.ndim: (0,) * nd)

    in_specs = [pl.BlockSpec((F, tile_b), lambda i: (0, i))] + [full_spec(a) for a in flat]
    out_specs = pl.BlockSpec((_OUT_ROWS, tile_b), lambda i: (0, i))
    out_shape = jax.ShapeDtypeStruct((_OUT_ROWS, b_pad), jnp.float32)

    out_t = pl.pallas_call(
        functools.partial(_fused_mlp_kernel, fuse_mid=fuse_mid, mm_dtype=mm_dtype),
        out_shape=out_shape,
        grid_spec=pltpu.PrefetchScalarGridSpec(
            num_scalar_prefetch=0,
            grid=grid,
            in_specs=in_specs,
            out_specs=out_specs,
        ),
        compiler_params=pltpu.CompilerParams(
            dimension_semantics=("parallel",),
        ),
    )(xT, *flat)

    # Single slice + transpose over the output (one HBM pass), then split.
    out_bt = out_t[:3, :B].T       # (B, 3)
    potential = out_bt[:, 0:1]     # (B, 1)
    gradient = out_bt[:, 1:3]      # (B, 2)
    return potential, gradient


def init_params(key):
    """Deterministic init matching the PyTorch layer shapes.

    PyTorch nn.Linear(in, out) stores weight (out, in); we store the transpose
    (in, out).  Init ~ U(-1/sqrt(in), 1/sqrt(in)) like the PyTorch default.
    """
    dims = {
        "fc1": (2, 128), "fc2": (128, 128), "fc3": (128, 128), "fc4": (128, 1),
        "fc5": (2, 128), "fc6": (128, 128), "fc7": (128, 128), "fc8": (128, 2),
    }
    params = {}
    keys = jax.random.split(key, 2 * len(dims))
    for idx, (name, (d_in, d_out)) in enumerate(dims.items()):
        bound = 1.0 / (d_in ** 0.5)
        W = jax.random.uniform(keys[2 * idx], (d_in, d_out), jnp.float32,
                               minval=-bound, maxval=bound)
        b = jax.random.uniform(keys[2 * idx + 1], (d_out,), jnp.float32,
                               minval=-bound, maxval=bound)
        params[name] = (W, b)
    return params


def reference_forward(x, params):
    """Pure-JAX f32 reference for correctness checking."""
    def lin(h, name):
        W, b = params[name]
        return h @ W + b

    h = jnp.tanh(lin(x, "fc1"))
    h = jnp.tanh(lin(h, "fc2"))
    h = jnp.tanh(lin(h, "fc3"))
    pot = lin(h, "fc4")

    g = jnp.tanh(lin(x, "fc5"))
    g = jnp.tanh(lin(g, "fc6"))
    g = jnp.tanh(lin(g, "fc7"))
    grad = lin(g, "fc8")
    return pot, grad


if __name__ == "__main__":
    key = jax.random.PRNGKey(0)
    pkey, xkey = jax.random.split(key)
    params = init_params(pkey)

    # B=8 exercises the single-tile path; B=300 exercises batch padding and a
    # multi-step grid (>= 2 "parallel" steps).
    for B in (8, 300):
        x = jax.random.normal(jax.random.fold_in(xkey, B), (B, 2), jnp.float32)
        pot_ref, grad_ref = reference_forward(x, params)

        # (use_bf16, tolerance): bf16 MXU path is the fast default; f32 path is
        # the tight-tolerance check of the packing / padding / layout logic.
        for use_bf16, tol in ((True, 5e-2), (False, 1e-5)):
            pot, grad = potential_gradient_forward(x, params, use_bf16=use_bf16)
            pot, grad = jax.block_until_ready((pot, grad))

            assert pot.shape == (B, 1) and grad.shape == (B, 2)
            assert jnp.allclose(pot, pot_ref, atol=tol, rtol=tol), (B, use_bf16)
            assert jnp.allclose(grad, grad_ref, atol=tol, rtol=tol), (B, use_bf16)

    print("KERNEL_OK")
</pallas_src>

<mosaic_0001>
module attributes {stable_mosaic.version = 11 : i64} {
  func.func @_fused_mlp_kernel(%arg0: i32, %arg1: memref<2x128xf32, #tpu.memory_space<vmem>>, %arg2: memref<256x2xf32, #tpu.memory_space<vmem>>, %arg3: memref<256x1xf32, #tpu.memory_space<vmem>>, %arg4: memref<256x256xbf16, #tpu.memory_space<vmem>>, %arg5: memref<256x1xf32, #tpu.memory_space<vmem>>, %arg6: memref<256x256xbf16, #tpu.memory_space<vmem>>, %arg7: memref<256x1xf32, #tpu.memory_space<vmem>>, %arg8: memref<8x256xbf16, #tpu.memory_space<vmem>>, %arg9: memref<8x1xf32, #tpu.memory_space<vmem>>, %arg10: memref<8x128xf32, #tpu.memory_space<vmem>>) attributes {dimension_semantics = [#tpu.dimension_semantics<parallel>], iteration_bounds = array<i64: 1>, scalar_prefetch = 0 : i64, scratch_operands = 0 : i64, tpu.core_type = #tpu.core_type<tc>, window_params = [{transform_indices = @transform_0, window_bounds = array<i64: 2, 128>}, {pipeline_mode = #tpu.pipeline_mode<synchronous>, transform_indices = @transform_1, window_bounds = array<i64: 256, 2>}, {pipeline_mode = #tpu.pipeline_mode<synchronous>, transform_indices = @transform_2, window_bounds = array<i64: 256, 1>}, {pipeline_mode = #tpu.pipeline_mode<synchronous>, transform_indices = @transform_3, window_bounds = array<i64: 256, 256>}, {pipeline_mode = #tpu.pipeline_mode<synchronous>, transform_indices = @transform_4, window_bounds = array<i64: 256, 1>}, {pipeline_mode = #tpu.pipeline_mode<synchronous>, transform_indices = @transform_5, window_bounds = array<i64: 256, 256>}, {pipeline_mode = #tpu.pipeline_mode<synchronous>, transform_indices = @transform_6, window_bounds = array<i64: 256, 1>}, {pipeline_mode = #tpu.pipeline_mode<synchronous>, transform_indices = @transform_7, window_bounds = array<i64: 8, 256>}, {pipeline_mode = #tpu.pipeline_mode<synchronous>, transform_indices = @transform_8, window_bounds = array<i64: 8, 1>}, {transform_indices = @transform_9, window_bounds = array<i64: 8, 128>}]} {
    %c0 = arith.constant 0 : index
    %c0_0 = arith.constant 0 : index
    %0 = vector.load %arg1[%c0, %c0_0] : memref<2x128xf32, #tpu.memory_space<vmem>>, vector<2x128xf32>
    %c0_1 = arith.constant 0 : index
    %c0_2 = arith.constant 0 : index
    %1 = vector.load %arg2[%c0_1, %c0_2] : memref<256x2xf32, #tpu.memory_space<vmem>>, vector<256x2xf32>
    %2 = vector.extract_strided_slice %1 {offsets = [0, 0], sizes = [256, 1], strides = [1, 1]} : vector<256x2xf32> to vector<256x1xf32>
    %3 = vector.extract_strided_slice %0 {offsets = [0, 0], sizes = [1, 128], strides = [1, 1]} : vector<2x128xf32> to vector<1x128xf32>
    %4 = vector.broadcast %2 : vector<256x1xf32> to vector<256x128xf32>
    %5 = vector.broadcast %3 : vector<1x128xf32> to vector<256x128xf32>
    %6 = arith.mulf %4, %5 : vector<256x128xf32>
    %7 = vector.extract_strided_slice %1 {offsets = [0, 1], sizes = [256, 1], strides = [1, 1]} : vector<256x2xf32> to vector<256x1xf32>
    %8 = vector.extract_strided_slice %0 {offsets = [1, 0], sizes = [1, 128], strides = [1, 1]} : vector<2x128xf32> to vector<1x128xf32>
    %9 = vector.broadcast %7 : vector<256x1xf32> to vector<256x128xf32>
    %10 = vector.broadcast %8 : vector<1x128xf32> to vector<256x128xf32>
    %11 = arith.mulf %9, %10 : vector<256x128xf32>
    %12 = arith.addf %6, %11 : vector<256x128xf32>
    %c0_3 = arith.constant 0 : index
    %c0_4 = arith.constant 0 : index
    %13 = vector.load %arg3[%c0_3, %c0_4] : memref<256x1xf32, #tpu.memory_space<vmem>>, vector<256x1xf32>
    %14 = vector.broadcast %13 : vector<256x1xf32> to vector<256x128xf32>
    %15 = arith.addf %12, %14 : vector<256x128xf32>
    %16 = math.tanh %15 : vector<256x128xf32>
    %c0_5 = arith.constant 0 : index
    %c0_6 = arith.constant 0 : index
    %17 = vector.load %arg4[%c0_5, %c0_6] : memref<256x256xbf16, #tpu.memory_space<vmem>>, vector<256x256xbf16>
    %18 = arith.truncf %16 : vector<256x128xf32> to vector<256x128xbf16>
    %cst = arith.constant dense<0.000000e+00> : vector<256x128xf32>
    %19 = tpu.matmul %17, %18, %cst {dimension_numbers = #tpu.dot_dimension_numbers<[1], [0], [0], [1], [0, 0, 1, 1], [], []>} : vector<256x256xbf16>, vector<256x128xbf16>, vector<256x128xf32> -> vector<256x128xf32>
    %c0_7 = arith.constant 0 : index
    %c0_8 = arith.constant 0 : index
    %20 = vector.load %arg5[%c0_7, %c0_8] : memref<256x1xf32, #tpu.memory_space<vmem>>, vector<256x1xf32>
    %21 = vector.broadcast %20 : vector<256x1xf32> to vector<256x128xf32>
    %22 = arith.addf %19, %21 : vector<256x128xf32>
    %23 = math.tanh %22 : vector<256x128xf32>
    %c0_9 = arith.constant 0 : index
    %c0_10 = arith.constant 0 : index
    %24 = vector.load %arg6[%c0_9, %c0_10] : memref<256x256xbf16, #tpu.memory_space<vmem>>, vector<256x256xbf16>
    %25 = arith.truncf %23 : vector<256x128xf32> to vector<256x128xbf16>
    %cst_11 = arith.constant dense<0.000000e+00> : vector<256x128xf32>
    %26 = tpu.matmul %24, %25, %cst_11 {dimension_numbers = #tpu.dot_dimension_numbers<[1], [0], [0], [1], [0, 0, 1, 1], [], []>} : vector<256x256xbf16>, vector<256x128xbf16>, vector<256x128xf32> -> vector<256x128xf32>
    %c0_12 = arith.constant 0 : index
    %c0_13 = arith.constant 0 : index
    %27 = vector.load %arg7[%c0_12, %c0_13] : memref<256x1xf32, #tpu.memory_space<vmem>>, vector<256x1xf32>
    %28 = vector.broadcast %27 : vector<256x1xf32> to vector<256x128xf32>
    %29 = arith.addf %26, %28 : vector<256x128xf32>
    %30 = math.tanh %29 : vector<256x128xf32>
    %c0_14 = arith.constant 0 : index
    %c0_15 = arith.constant 0 : index
    %31 = vector.load %arg8[%c0_14, %c0_15] : memref<8x256xbf16, #tpu.memory_space<vmem>>, vector<8x256xbf16>
    %32 = arith.truncf %30 : vector<256x128xf32> to vector<256x128xbf16>
    %cst_16 = arith.constant dense<0.000000e+00> : vector<8x128xf32>
    %33 = tpu.matmul %31, %32, %cst_16 {dimension_numbers = #tpu.dot_dimension_numbers<[1], [0], [0], [1], [0, 0, 1, 1], [], []>} : vector<8x256xbf16>, vector<256x128xbf16>, vector<8x128xf32> -> vector<8x128xf32>
    %c0_17 = arith.constant 0 : index
    %c0_18 = arith.constant 0 : index
    %34 = vector.load %arg9[%c0_17, %c0_18] : memref<8x1xf32, #tpu.memory_space<vmem>>, vector<8x1xf32>
    %35 = vector.broadcast %34 : vector<8x1xf32> to vector<8x128xf32>
    %36 = arith.addf %33, %35 : vector<8x128xf32>
    %c0_19 = arith.constant 0 : index
    %c0_20 = arith.constant 0 : index
    %37 = vector.load %arg10[%c0_19, %c0_20] : memref<8x128xf32, #tpu.memory_space<vmem>>, vector<8x128xf32>
    tpu.vector_store %arg10[%c0_19, %c0_20], %36 {strides = array<i32>} : memref<8x128xf32, #tpu.memory_space<vmem>>, vector<8x128xf32>,
    return
  }
  func.func @transform_0(%arg0: i32) -> (i32, i32) {
    %c0_i32 = arith.constant 0 : i32
    %c0_i32_0 = arith.constant 0 : i32
    return %c0_i32, %arg0 : i32, i32
  }
  func.func @transform_1(%arg0: i32) -> (i32, i32) {
    %c0_i32 = arith.constant 0 : i32
    %c0_i32_0 = arith.constant 0 : i32
    %c0_i32_1 = arith.constant 0 : i32
    return %c0_i32, %c0_i32_0 : i32, i32
  }
  func.func @transform_2(%arg0: i32) -> (i32, i32) {
    %c0_i32 = arith.constant 0 : i32
    %c0_i32_0 = arith.constant 0 : i32
    %c0_i32_1 = arith.constant 0 : i32
    return %c0_i32, %c0_i32_0 : i32, i32
  }
  func.func @transform_3(%arg0: i32) -> (i32, i32) {
    %c0_i32 = arith.constant 0 : i32
    %c0_i32_0 = arith.constant 0 : i32
    %c0_i32_1 = arith.constant 0 : i32
    return %c0_i32, %c0_i32_0 : i32, i32
  }
  func.func @transform_4(%arg0: i32) -> (i32, i32) {
    %c0_i32 = arith.constant 0 : i32
    %c0_i32_0 = arith.constant 0 : i32
    %c0_i32_1 = arith.constant 0 : i32
    return %c0_i32, %c0_i32_0 : i32, i32
  }
  func.func @transform_5(%arg0: i32) -> (i32, i32) {
    %c0_i32 = arith.constant 0 : i32
    %c0_i32_0 = arith.constant 0 : i32
    %c0_i32_1 = arith.constant 0 : i32
    return %c0_i32, %c0_i32_0 : i32, i32
  }
  func.func @transform_6(%arg0: i32) -> (i32, i32) {
    %c0_i32 = arith.constant 0 : i32
    %c0_i32_0 = arith.constant 0 : i32
    %c0_i32_1 = arith.constant 0 : i32
    return %c0_i32, %c0_i32_0 : i32, i32
  }
  func.func @transform_7(%arg0: i32) -> (i32, i32) {
    %c0_i32 = arith.constant 0 : i32
    %c0_i32_0 = arith.constant 0 : i32
    %c0_i32_1 = arith.constant 0 : i32
    return %c0_i32, %c0_i32_0 : i32, i32
  }
  func.func @transform_8(%arg0: i32) -> (i32, i32) {
    %c0_i32 = arith.constant 0 : i32
    %c0_i32_0 = arith.constant 0 : i32
    %c0_i32_1 = arith.constant 0 : i32
    return %c0_i32, %c0_i32_0 : i32, i32
  }
  func.func @transform_9(%arg0: i32) -> (i32, i32) {
    %c0_i32 = arith.constant 0 : i32
    %c0_i32_0 = arith.constant 0 : i32
    return %c0_i32, %arg0 : i32, i32
  }
}

</mosaic_0001>

<llo_original>
// kernel: tpu_custom_call.1
$region0: #{tpu_custom_call.1}
  #allocation0 [shape = 'u32[]', space=smem, size = 0x4, offset = 0x4, fixed_abs, tag = 'smem constant byte address 0x4 - core index']
  #allocation1 [shape = 'u32[144,128]{1,0:T(1,128)}', space=vmem, size = 0x12000, scoped, tag = 'internal scratch']
  %s0 = inlined_call_operand.vmem [shape: f32[2,128], index: 0, kind: input, shape index: {}]
  %s1 = inlined_call_operand.vmem [shape: f32[256,2], index: 1, kind: input, shape index: {}]
  %s2 = inlined_call_operand.vmem [shape: f32[256,1], index: 2, kind: input, shape index: {}]
  %s3 = inlined_call_operand.vmem [shape: bf16[256,256], index: 3, kind: input, shape index: {}]
  %s4 = inlined_call_operand.vmem [shape: f32[256,1], index: 4, kind: input, shape index: {}]
  %s5 = inlined_call_operand.vmem [shape: bf16[256,256], index: 5, kind: input, shape index: {}]
  %s6 = inlined_call_operand.vmem [shape: f32[256,1], index: 6, kind: input, shape index: {}]
  %s7 = inlined_call_operand.vmem [shape: bf16[8,256], index: 7, kind: input, shape index: {}]
  %s8 = inlined_call_operand.vmem [shape: f32[8,1], index: 8, kind: input, shape index: {}]
  %s9 = inlined_call_operand.hbm [shape: f32[8,128], index: 9, kind: output, shape index: {}]
  %s10 = sld [smem:[#allocation0]]
  $region46: #{tpu_custom_call.1} parent=0
    _
  %s12 = ssub.s32 1, %s10
  %s13 = scalar_select 0, %s12, %s10
  $region1: #{tpu_custom_call.1} parent=0
    #allocation2 [shape = 'u8[4096]{0}', space=vmem, size = 0x1000, scoped, tag = 'output window, operand 0, single buffered']
    #allocation3 [shape = 's32[1]{0}', space=sflag, size = 0x4, scoped, tag = 'scoped memory for tpu_custom_call.1']
    %14 = vsyncpa [#allocation3], 0
    // Predicated region
    $region2: #{tpu_custom_call.1} parent=1 // pred_check
      _
    $region3: #{tpu_custom_call.1} parent=1 // pred_check_branch
      %16 = sbr.rel (0) target = $region5
    $region4: #{tpu_custom_call.1} parent=1 // pred_region
      _
    $region5: #{tpu_custom_call.1} parent=1 // pred_fallthru
      _
    // Predicated region
    $region6: #{tpu_custom_call.1} parent=1 // pred_check
      _
    $region7: #{tpu_custom_call.1} parent=1 // pred_check_branch
      %18 = sbr.rel (0) target = $region9
    $region8: #{tpu_custom_call.1} parent=1 // pred_region
      _
    $region9: #{tpu_custom_call.1} parent=1 // pred_fallthru
      _
    // Predicated region
    $region10: #{tpu_custom_call.1} parent=1 // pred_check
      _
    $region11: #{tpu_custom_call.1} parent=1 // pred_check_branch
      %20 = sbr.rel (0) target = $region13
    $region12: #{tpu_custom_call.1} parent=1 // pred_region
      _
    $region13: #{tpu_custom_call.1} parent=1 // pred_fallthru
      _
    // Predicated region
    $region14: #{tpu_custom_call.1} parent=1 // pred_check
      _
    $region15: #{tpu_custom_call.1} parent=1 // pred_check_branch
      %22 = sbr.rel (0) target = $region17
    $region16: #{tpu_custom_call.1} parent=1 // pred_region
      _
    $region17: #{tpu_custom_call.1} parent=1 // pred_fallthru
      _
    // Predicated region
    $region18: #{tpu_custom_call.1} parent=1 // pred_check
      _
    $region19: #{tpu_custom_call.1} parent=1 // pred_check_branch
      %24 = sbr.rel (0) target = $region21
    $region20: #{tpu_custom_call.1} parent=1 // pred_region
      _
    $region21: #{tpu_custom_call.1} parent=1 // pred_fallthru
      _
    // Predicated region
    $region22: #{tpu_custom_call.1} parent=1 // pred_check
      _
    $region23: #{tpu_custom_call.1} parent=1 // pred_check_branch
      %26 = sbr.rel (0) target = $region25
    $region24: #{tpu_custom_call.1} parent=1 // pred_region
      _
    $region25: #{tpu_custom_call.1} parent=1 // pred_fallthru
      _
    // Predicated region
    $region26: #{tpu_custom_call.1} parent=1 // pred_check
      _
    $region27: #{tpu_custom_call.1} parent=1 // pred_check_branch
      %28 = sbr.rel (0) target = $region29
    $region28: #{tpu_custom_call.1} parent=1 // pred_region
      _
    $region29: #{tpu_custom_call.1} parent=1 // pred_fallthru
      _
    // Predicated region
    $region30: #{tpu_custom_call.1} parent=1 // pred_check
      _
    $region31: #{tpu_custom_call.1} parent=1 // pred_check_branch
      %30 = sbr.rel (0) target = $region33
    $region32: #{tpu_custom_call.1} parent=1 // pred_region
      _
    $region33: #{tpu_custom_call.1} parent=1 // pred_fallthru
      _
    // Predicated region
    $region34: #{tpu_custom_call.1} parent=1 // pred_check
      _
    $region35: #{tpu_custom_call.1} parent=1 // pred_check_branch
      %32 = sbr.rel (0) target = $region37
    $region36: #{tpu_custom_call.1} parent=1 // pred_region
      _
    $region37: #{tpu_custom_call.1} parent=1 // pred_fallthru
      _
    %v34 = vld [vmem:[%s0] sm:$0x3]
    %v35 = vld [vmem:[%s1] sm:$0xff]
    %v36 = vld [vmem:[%s1 + $0x8] sm:$0xff]
    %v37 = vld [vmem:[%s1 + $0x10] sm:$0xff]
    %v38 = vld [vmem:[%s1 + $0x18] sm:$0xff]
    %v39 = vld [vmem:[%s1 + $0x20] sm:$0xff]
    %v40 = vld [vmem:[%s1 + $0x28] sm:$0xff]
    %v41 = vld [vmem:[%s1 + $0x30] sm:$0xff]
    %v42 = vld [vmem:[%s1 + $0x38] sm:$0xff]
    %v43 = vld [vmem:[%s1 + $0x40] sm:$0xff]
    %v44 = vld [vmem:[%s1 + $0x48] sm:$0xff]
    %v45 = vld [vmem:[%s1 + $0x50] sm:$0xff]
    %v46 = vld [vmem:[%s1 + $0x58] sm:$0xff]
    %v47 = vld [vmem:[%s1 + $0x60] sm:$0xff]
    %v48 = vld [vmem:[%s1 + $0x68] sm:$0xff]
    %v49 = vld [vmem:[%s1 + $0x70] sm:$0xff]
    %v50 = vld [vmem:[%s1 + $0x78] sm:$0xff]
    %v51 = vld [vmem:[%s1 + $0x80] sm:$0xff]
    %v52 = vld [vmem:[%s1 + $0x88] sm:$0xff]
    %v53 = vld [vmem:[%s1 + $0x90] sm:$0xff]
    %v54 = vld [vmem:[%s1 + $0x98] sm:$0xff]
    %v55 = vld [vmem:[%s1 + $0xa0] sm:$0xff]
    %v56 = vld [vmem:[%s1 + $0xa8] sm:$0xff]
    %v57 = vld [vmem:[%s1 + $0xb0] sm:$0xff]
    %v58 = vld [vmem:[%s1 + $0xb8] sm:$0xff]
    %v59 = vld [vmem:[%s1 + $0xc0] sm:$0xff]
    %v60 = vld [vmem:[%s1 + $0xc8] sm:$0xff]
    %v61 = vld [vmem:[%s1 + $0xd0] sm:$0xff]
    %v62 = vld [vmem:[%s1 + $0xd8] sm:$0xff]
    %v63 = vld [vmem:[%s1 + $0xe0] sm:$0xff]
    %v64 = vld [vmem:[%s1 + $0xe8] sm:$0xff]
    %v65 = vld [vmem:[%s1 + $0xf0] sm:$0xff]
    %v66 = vld [vmem:[%s1 + $0xf8] sm:$0xff]
    %68 = vset.pattern.permute.xlu0 0
    %69 = vperm.xlu0 %68, %v35
    %v70 = vpop.permute.xlu0 %69
    %73 = vset.pattern.permute.xlu0 0
    %74 = vperm.xlu0 %73, %v36
    %v75 = vpop.permute.xlu0 %74
    %78 = vset.pattern.permute.xlu0 0
    %79 = vperm.xlu0 %78, %v37
    %v80 = vpop.permute.xlu0 %79
    %83 = vset.pattern.permute.xlu0 0
    %84 = vperm.xlu0 %83, %v38
    %v85 = vpop.permute.xlu0 %84
    %88 = vset.pattern.permute.xlu0 0
    %89 = vperm.xlu0 %88, %v39
    %v90 = vpop.permute.xlu0 %89
    %93 = vset.pattern.permute.xlu0 0
    %94 = vperm.xlu0 %93, %v40
    %v95 = vpop.permute.xlu0 %94
    %98 = vset.pattern.permute.xlu0 0
    %99 = vperm.xlu0 %98, %v41
    %v100 = vpop.permute.xlu0 %99
    %103 = vset.pattern.permute.xlu0 0
    %104 = vperm.xlu0 %103, %v42
    %v105 = vpop.permute.xlu0 %104
    %108 = vset.pattern.permute.xlu0 0
    %109 = vperm.xlu0 %108, %v43
    %v110 = vpop.permute.xlu0 %109
    %113 = vset.pattern.permute.xlu0 0
    %114 = vperm.xlu0 %113, %v44
    %v115 = vpop.permute.xlu0 %114
    %118 = vset.pattern.permute.xlu0 0
    %119 = vperm.xlu0 %118, %v45
    %v120 = vpop.permute.xlu0 %119
    %123 = vset.pattern.permute.xlu0 0
    %124 = vperm.xlu0 %123, %v46
    %v125 = vpop.permute.xlu0 %124
    %128 = vset.pattern.permute.xlu0 0
    %129 = vperm.xlu0 %128, %v47
    %v130 = vpop.permute.xlu0 %129
    %133 = vset.pattern.permute.xlu0 0
    %134 = vperm.xlu0 %133, %v48
    %v135 = vpop.permute.xlu0 %134
    %138 = vset.pattern.permute.xlu0 0
    %139 = vperm.xlu0 %138, %v49
    %v140 = vpop.permute.xlu0 %139
    %143 = vset.pattern.permute.xlu0 0
    %144 = vperm.xlu0 %143, %v50
    %v145 = vpop.permute.xlu0 %144
    %148 = vset.pattern.permute.xlu0 0
    %149 = vperm.xlu0 %148, %v51
    %v150 = vpop.permute.xlu0 %149
    %153 = vset.pattern.permute.xlu0 0
    %154 = vperm.xlu0 %153, %v52
    %v155 = vpop.permute.xlu0 %154
    %158 = vset.pattern.permute.xlu0 0
    %159 = vperm.xlu0 %158, %v53
    %v160 = vpop.permute.xlu0 %159
    %163 = vset.pattern.permute.xlu0 0
    %164 = vperm.xlu0 %163, %v54
    %v165 = vpop.permute.xlu0 %164
    %168 = vset.pattern.permute.xlu0 0
    %169 = vperm.xlu0 %168, %v55
    %v170 = vpop.permute.xlu0 %169
    %173 = vset.pattern.permute.xlu0 0
    %174 = vperm.xlu0 %173, %v56
    %v175 = vpop.permute.xlu0 %174
    %178 = vset.pattern.permute.xlu0 0
    %179 = vperm.xlu0 %178, %v57
    %v180 = vpop.permute.xlu0 %179
    %183 = vset.pattern.permute.xlu0 0
    %184 = vperm.xlu0 %183, %v58
    %v185 = vpop.permute.xlu0 %184
    %188 = vset.pattern.permute.xlu0 0
    %189 = vperm.xlu0 %188, %v59
    %v190 = vpop.permute.xlu0 %189
    %193 = vset.pattern.permute.xlu0 0
    %194 = vperm.xlu0 %193, %v60
    %v195 = vpop.permute.xlu0 %194
    %198 = vset.pattern.permute.xlu0 0
    %199 = vperm.xlu0 %198, %v61
    %v200 = vpop.permute.xlu0 %199
    %203 = vset.pattern.permute.xlu0 0
    %204 = vperm.xlu0 %203, %v62
    %v205 = vpop.permute.xlu0 %204
    %208 = vset.pattern.permute.xlu0 0
    %209 = vperm.xlu0 %208, %v63
    %v210 = vpop.permute.xlu0 %209
    %213 = vset.pattern.permute.xlu0 0
    %214 = vperm.xlu0 %213, %v64
    %v215 = vpop.permute.xlu0 %214
    %218 = vset.pattern.permute.xlu0 0
    %219 = vperm.xlu0 %218, %v65
    %v220 = vpop.permute.xlu0 %219
    %223 = vset.pattern.permute.xlu0 0
    %224 = vperm.xlu0 %223, %v66
    %v225 = vpop.permute.xlu0 %224
    %v227 = vlaneseq
    %v228 = vshrl.u32 %v227, 7
    %v229 = vsub.s32 0, %v228
    %v230 = vrot.slane %v34, %v229
    %v231 = vmul.f32 %v70, %v230
    %v232 = vmul.f32 %v75, %v230
    %v233 = vmul.f32 %v80, %v230
    %v234 = vmul.f32 %v85, %v230
    %v235 = vmul.f32 %v90, %v230
    %v236 = vmul.f32 %v95, %v230
    %v237 = vmul.f32 %v100, %v230
    %v238 = vmul.f32 %v105, %v230
    %v239 = vmul.f32 %v110, %v230
    %v240 = vmul.f32 %v115, %v230
    %v241 = vmul.f32 %v120, %v230
    %v242 = vmul.f32 %v125, %v230
    %v243 = vmul.f32 %v130, %v230
    %v244 = vmul.f32 %v135, %v230
    %v245 = vmul.f32 %v140, %v230
    %v246 = vmul.f32 %v145, %v230
    %v247 = vmul.f32 %v150, %v230
    %v248 = vmul.f32 %v155, %v230
    %v249 = vmul.f32 %v160, %v230
    %v250 = vmul.f32 %v165, %v230
    %v251 = vmul.f32 %v170, %v230
    %v252 = vmul.f32 %v175, %v230
    %v253 = vmul.f32 %v180, %v230
    %v254 = vmul.f32 %v185, %v230
    %v255 = vmul.f32 %v190, %v230
    %v256 = vmul.f32 %v195, %v230
    %v257 = vmul.f32 %v200, %v230
    %v258 = vmul.f32 %v205, %v230
    %v259 = vmul.f32 %v210, %v230
    %v260 = vmul.f32 %v215, %v230
    %v261 = vmul.f32 %v220, %v230
    %v262 = vmul.f32 %v225, %v230
    %263 = vset.pattern.permute.xlu0 1
    %264 = vperm.xlu0 %263, %v35
    %v265 = vpop.permute.xlu0 %264
    %267 = vset.pattern.permute.xlu0 1
    %268 = vperm.xlu0 %267, %v36
    %v269 = vpop.permute.xlu0 %268
    %271 = vset.pattern.permute.xlu0 1
    %272 = vperm.xlu0 %271, %v37
    %v273 = vpop.permute.xlu0 %272
    %275 = vset.pattern.permute.xlu0 1
    %276 = vperm.xlu0 %275, %v38
    %v277 = vpop.permute.xlu0 %276
    %279 = vset.pattern.permute.xlu0 1
    %280 = vperm.xlu0 %279, %v39
    %v281 = vpop.permute.xlu0 %280
    %283 = vset.pattern.permute.xlu0 1
    %284 = vperm.xlu0 %283, %v40
    %v285 = vpop.permute.xlu0 %284
    %287 = vset.pattern.permute.xlu0 1
    %288 = vperm.xlu0 %287, %v41
    %v289 = vpop.permute.xlu0 %288
    %291 = vset.pattern.permute.xlu0 1
    %292 = vperm.xlu0 %291, %v42
    %v293 = vpop.permute.xlu0 %292
    %295 = vset.pattern.permute.xlu0 1
    %296 = vperm.xlu0 %295, %v43
    %v297 = vpop.permute.xlu0 %296
    %299 = vset.pattern.permute.xlu0 1
    %300 = vperm.xlu0 %299, %v44
    %v301 = vpop.permute.xlu0 %300
    %303 = vset.pattern.permute.xlu0 1
    %304 = vperm.xlu0 %303, %v45
    %v305 = vpop.permute.xlu0 %304
    %307 = vset.pattern.permute.xlu0 1
    %308 = vperm.xlu0 %307, %v46
    %v309 = vpop.permute.xlu0 %308
    %311 = vset.pattern.permute.xlu0 1
    %312 = vperm.xlu0 %311, %v47
    %v313 = vpop.permute.xlu0 %312
    %315 = vset.pattern.permute.xlu0 1
    %316 = vperm.xlu0 %315, %v48
    %v317 = vpop.permute.xlu0 %316
    %319 = vset.pattern.permute.xlu0 1
    %320 = vperm.xlu0 %319, %v49
    %v321 = vpop.permute.xlu0 %320
    %323 = vset.pattern.permute.xlu0 1
    %324 = vperm.xlu0 %323, %v50
    %v325 = vpop.permute.xlu0 %324
    %327 = vset.pattern.permute.xlu0 1
    %328 = vperm.xlu0 %327, %v51
    %v329 = vpop.permute.xlu0 %328
    %331 = vset.pattern.permute.xlu0 1
    %332 = vperm.xlu0 %331, %v52
    %v333 = vpop.permute.xlu0 %332
    %335 = vset.pattern.permute.xlu0 1
    %336 = vperm.xlu0 %335, %v53
    %v337 = vpop.permute.xlu0 %336
    %339 = vset.pattern.permute.xlu0 1
    %340 = vperm.xlu0 %339, %v54
    %v341 = vpop.permute.xlu0 %340
    %343 = vset.pattern.permute.xlu0 1
    %344 = vperm.xlu0 %343, %v55
    %v345 = vpop.permute.xlu0 %344
    %347 = vset.pattern.permute.xlu0 1
    %348 = vperm.xlu0 %347, %v56
    %v349 = vpop.permute.xlu0 %348
    %351 = vset.pattern.permute.xlu0 1
    %352 = vperm.xlu0 %351, %v57
    %v353 = vpop.permute.xlu0 %352
    %355 = vset.pattern.permute.xlu0 1
    %356 = vperm.xlu0 %355, %v58
    %v357 = vpop.permute.xlu0 %356
    %359 = vset.pattern.permute.xlu0 1
    %360 = vperm.xlu0 %359, %v59
    %v361 = vpop.permute.xlu0 %360
    %363 = vset.pattern.permute.xlu0 1
    %364 = vperm.xlu0 %363, %v60
    %v365 = vpop.permute.xlu0 %364
    %367 = vset.pattern.permute.xlu0 1
    %368 = vperm.xlu0 %367, %v61
    %v369 = vpop.permute.xlu0 %368
    %371 = vset.pattern.permute.xlu0 1
    %372 = vperm.xlu0 %371, %v62
    %v373 = vpop.permute.xlu0 %372
    %375 = vset.pattern.permute.xlu0 1
    %376 = vperm.xlu0 %375, %v63
    %v377 = vpop.permute.xlu0 %376
    %379 = vset.pattern.permute.xlu0 1
    %380 = vperm.xlu0 %379, %v64
    %v381 = vpop.permute.xlu0 %380
    %383 = vset.pattern.permute.xlu0 1
    %384 = vperm.xlu0 %383, %v65
    %v385 = vpop.permute.xlu0 %384
    %387 = vset.pattern.permute.xlu0 1
    %388 = vperm.xlu0 %387, %v66
    %v389 = vpop.permute.xlu0 %388
    %v391 = vlaneseq
    %v392 = vshrl.u32 %v391, 7
    %v393 = vsub.s32 1, %v392
    %v394 = vrot.slane %v34, %v393
    %v395 = vmul.f32 %v265, %v394
    %v396 = vmul.f32 %v269, %v394
    %v397 = vmul.f32 %v273, %v394
    %v398 = vmul.f32 %v277, %v394
    %v399 = vmul.f32 %v281, %v394
    %v400 = vmul.f32 %v285, %v394
    %v401 = vmul.f32 %v289, %v394
    %v402 = vmul.f32 %v293, %v394
    %v403 = vmul.f32 %v297, %v394
    %v404 = vmul.f32 %v301, %v394
    %v405 = vmul.f32 %v305, %v394
    %v406 = vmul.f32 %v309, %v394
    %v407 = vmul.f32 %v313, %v394
    %v408 = vmul.f32 %v317, %v394
    %v409 = vmul.f32 %v321, %v394
    %v410 = vmul.f32 %v325, %v394
    %v411 = vmul.f32 %v329, %v394
    %v412 = vmul.f32 %v333, %v394
    %v413 = vmul.f32 %v337, %v394
    %v414 = vmul.f32 %v341, %v394
    %v415 = vmul.f32 %v345, %v394
    %v416 = vmul.f32 %v349, %v394
    %v417 = vmul.f32 %v353, %v394
    %v418 = vmul.f32 %v357, %v394
    %v419 = vmul.f32 %v361, %v394
    %v420 = vmul.f32 %v365, %v394
    %v421 = vmul.f32 %v369, %v394
    %v422 = vmul.f32 %v373, %v394
    %v423 = vmul.f32 %v377, %v394
    %v424 = vmul.f32 %v381, %v394
    %v425 = vmul.f32 %v385, %v394
    %v426 = vmul.f32 %v389, %v394
    %v427 = vadd.f32 %v231, %v395
    %v428 = vadd.f32 %v232, %v396
    %v429 = vadd.f32 %v233, %v397
    %v430 = vadd.f32 %v234, %v398
    %v431 = vadd.f32 %v235, %v399
    %v432 = vadd.f32 %v236, %v400
    %v433 = vadd.f32 %v237, %v401
    %v434 = vadd.f32 %v238, %v402
    %v435 = vadd.f32 %v239, %v403
    %v436 = vadd.f32 %v240, %v404
    %v437 = vadd.f32 %v241, %v405
    %v438 = vadd.f32 %v242, %v406
    %v439 = vadd.f32 %v243, %v407
    %v440 = vadd.f32 %v244, %v408
    %v441 = vadd.f32 %v245, %v409
    %v442 = vadd.f32 %v246, %v410
    %v443 = vadd.f32 %v247, %v411
    %v444 = vadd.f32 %v248, %v412
    %v445 = vadd.f32 %v249, %v413
    %v446 = vadd.f32 %v250, %v414
    %v447 = vadd.f32 %v251, %v415
    %v448 = vadd.f32 %v252, %v416
    %v449 = vadd.f32 %v253, %v417
    %v450 = vadd.f32 %v254, %v418
    %v451 = vadd.f32 %v255, %v419
    %v452 = vadd.f32 %v256, %v420
    %v453 = vadd.f32 %v257, %v421
    %v454 = vadd.f32 %v258, %v422
    %v455 = vadd.f32 %v259, %v423
    %v456 = vadd.f32 %v260, %v424
    %v457 = vadd.f32 %v261, %v425
    %v458 = vadd.f32 %v262, %v426
    %v459 = vld [vmem:[%s2] sm:$0xff]
    %v460 = vld [vmem:[%s2 + $0x8] sm:$0xff]
    %v461 = vld [vmem:[%s2 + $0x10] sm:$0xff]
    %v462 = vld [vmem:[%s2 + $0x18] sm:$0xff]
    %v463 = vld [vmem:[%s2 + $0x20] sm:$0xff]
    %v464 = vld [vmem:[%s2 + $0x28] sm:$0xff]
    %v465 = vld [vmem:[%s2 + $0x30] sm:$0xff]
    %v466 = vld [vmem:[%s2 + $0x38] sm:$0xff]
    %v467 = vld [vmem:[%s2 + $0x40] sm:$0xff]
    %v468 = vld [vmem:[%s2 + $0x48] sm:$0xff]
    %v469 = vld [vmem:[%s2 + $0x50] sm:$0xff]
    %v470 = vld [vmem:[%s2 + $0x58] sm:$0xff]
    %v471 = vld [vmem:[%s2 + $0x60] sm:$0xff]
    %v472 = vld [vmem:[%s2 + $0x68] sm:$0xff]
    %v473 = vld [vmem:[%s2 + $0x70] sm:$0xff]
    %v474 = vld [vmem:[%s2 + $0x78] sm:$0xff]
    %v475 = vld [vmem:[%s2 + $0x80] sm:$0xff]
    %v476 = vld [vmem:[%s2 + $0x88] sm:$0xff]
    %v477 = vld [vmem:[%s2 + $0x90] sm:$0xff]
    %v478 = vld [vmem:[%s2 + $0x98] sm:$0xff]
    %v479 = vld [vmem:[%s2 + $0xa0] sm:$0xff]
    %v480 = vld [vmem:[%s2 + $0xa8] sm:$0xff]
    %v481 = vld [vmem:[%s2 + $0xb0] sm:$0xff]
    %v482 = vld [vmem:[%s2 + $0xb8] sm:$0xff]
    %v483 = vld [vmem:[%s2 + $0xc0] sm:$0xff]
    %v484 = vld [vmem:[%s2 + $0xc8] sm:$0xff]
    %v485 = vld [vmem:[%s2 + $0xd0] sm:$0xff]
    %v486 = vld [vmem:[%s2 + $0xd8] sm:$0xff]
    %v487 = vld [vmem:[%s2 + $0xe0] sm:$0xff]
    %v488 = vld [vmem:[%s2 + $0xe8] sm:$0xff]
    %v489 = vld [vmem:[%s2 + $0xf0] sm:$0xff]
    %v490 = vld [vmem:[%s2 + $0xf8] sm:$0xff]
    %492 = vset.pattern.permute.xlu0 0
    %493 = vperm.xlu0 %492, %v459
    %v494 = vpop.permute.xlu0 %493
    %497 = vset.pattern.permute.xlu0 0
    %498 = vperm.xlu0 %497, %v460
    %v499 = vpop.permute.xlu0 %498
    %502 = vset.pattern.permute.xlu0 0
    %503 = vperm.xlu0 %502, %v461
    %v504 = vpop.permute.xlu0 %503
    %507 = vset.pattern.permute.xlu0 0
    %508 = vperm.xlu0 %507, %v462
    %v509 = vpop.permute.xlu0 %508
    %512 = vset.pattern.permute.xlu0 0
    %513 = vperm.xlu0 %512, %v463
    %v514 = vpop.permute.xlu0 %513
    %517 = vset.pattern.permute.xlu0 0
    %518 = vperm.xlu0 %517, %v464
    %v519 = vpop.permute.xlu0 %518
    %522 = vset.pattern.permute.xlu0 0
    %523 = vperm.xlu0 %522, %v465
    %v524 = vpop.permute.xlu0 %523
    %527 = vset.pattern.permute.xlu0 0
    %528 = vperm.xlu0 %527, %v466
    %v529 = vpop.permute.xlu0 %528
    %532 = vset.pattern.permute.xlu0 0
    %533 = vperm.xlu0 %532, %v467
    %v534 = vpop.permute.xlu0 %533
    %537 = vset.pattern.permute.xlu0 0
    %538 = vperm.xlu0 %537, %v468
    %v539 = vpop.permute.xlu0 %538
    %542 = vset.pattern.permute.xlu0 0
    %543 = vperm.xlu0 %542, %v469
    %v544 = vpop.permute.xlu0 %543
    %547 = vset.pattern.permute.xlu0 0
    %548 = vperm.xlu0 %547, %v470
    %v549 = vpop.permute.xlu0 %548
    %552 = vset.pattern.permute.xlu0 0
    %553 = vperm.xlu0 %552, %v471
    %v554 = vpop.permute.xlu0 %553
    %557 = vset.pattern.permute.xlu0 0
    %558 = vperm.xlu0 %557, %v472
    %v559 = vpop.permute.xlu0 %558
    %562 = vset.pattern.permute.xlu0 0
    %563 = vperm.xlu0 %562, %v473
    %v564 = vpop.permute.xlu0 %563
    %567 = vset.pattern.permute.xlu0 0
    %568 = vperm.xlu0 %567, %v474
    %v569 = vpop.permute.xlu0 %568
    %572 = vset.pattern.permute.xlu0 0
    %573 = vperm.xlu0 %572, %v475
    %v574 = vpop.permute.xlu0 %573
    %577 = vset.pattern.permute.xlu0 0
    %578 = vperm.xlu0 %577, %v476
    %v579 = vpop.permute.xlu0 %578
    %582 = vset.pattern.permute.xlu0 0
    %583 = vperm.xlu0 %582, %v477
    %v584 = vpop.permute.xlu0 %583
    %587 = vset.pattern.permute.xlu0 0
    %588 = vperm.xlu0 %587, %v478
    %v589 = vpop.permute.xlu0 %588
    %592 = vset.pattern.permute.xlu0 0
    %593 = vperm.xlu0 %592, %v479
    %v594 = vpop.permute.xlu0 %593
    %597 = vset.pattern.permute.xlu0 0
    %598 = vperm.xlu0 %597, %v480
    %v599 = vpop.permute.xlu0 %598
    %602 = vset.pattern.permute.xlu0 0
    %603 = vperm.xlu0 %602, %v481
    %v604 = vpop.permute.xlu0 %603
    %607 = vset.pattern.permute.xlu0 0
    %608 = vperm.xlu0 %607, %v482
    %v609 = vpop.permute.xlu0 %608
    %612 = vset.pattern.permute.xlu0 0
    %613 = vperm.xlu0 %612, %v483
    %v614 = vpop.permute.xlu0 %613
    %617 = vset.pattern.permute.xlu0 0
    %618 = vperm.xlu0 %617, %v484
    %v619 = vpop.permute.xlu0 %618
    %622 = vset.pattern.permute.xlu0 0
    %623 = vperm.xlu0 %622, %v485
    %v624 = vpop.permute.xlu0 %623
    %627 = vset.pattern.permute.xlu0 0
    %628 = vperm.xlu0 %627, %v486
    %v629 = vpop.permute.xlu0 %628
    %632 = vset.pattern.permute.xlu0 0
    %633 = vperm.xlu0 %632, %v487
    %v634 = vpop.permute.xlu0 %633
    %637 = vset.pattern.permute.xlu0 0
    %638 = vperm.xlu0 %637, %v488
    %v639 = vpop.permute.xlu0 %638
    %642 = vset.pattern.permute.xlu0 0
    %643 = vperm.xlu0 %642, %v489
    %v644 = vpop.permute.xlu0 %643
    %647 = vset.pattern.permute.xlu0 0
    %648 = vperm.xlu0 %647, %v490
    %v649 = vpop.permute.xlu0 %648
    %v651 = vadd.f32 %v427, %v494
    %v652 = vadd.f32 %v428, %v499
    %v653 = vadd.f32 %v429, %v504
    %v654 = vadd.f32 %v430, %v509
    %v655 = vadd.f32 %v431, %v514
    %v656 = vadd.f32 %v432, %v519
    %v657 = vadd.f32 %v433, %v524
    %v658 = vadd.f32 %v434, %v529
    %v659 = vadd.f32 %v435, %v534
    %v660 = vadd.f32 %v436, %v539
    %v661 = vadd.f32 %v437, %v544
    %v662 = vadd.f32 %v438, %v549
    %v663 = vadd.f32 %v439, %v554
    %v664 = vadd.f32 %v440, %v559
    %v665 = vadd.f32 %v441, %v564
    %v666 = vadd.f32 %v442, %v569
    %v667 = vadd.f32 %v443, %v574
    %v668 = vadd.f32 %v444, %v579
    %v669 = vadd.f32 %v445, %v584
    %v670 = vadd.f32 %v446, %v589
    %v671 = vadd.f32 %v447, %v594
    %v672 = vadd.f32 %v448, %v599
    %v673 = vadd.f32 %v449, %v604
    %v674 = vadd.f32 %v450, %v609
    %v675 = vadd.f32 %v451, %v614
    %v676 = vadd.f32 %v452, %v619
    %v677 = vadd.f32 %v453, %v624
    %v678 = vadd.f32 %v454, %v629
    %v679 = vadd.f32 %v455, %v634
    %v680 = vadd.f32 %v456, %v639
    %v681 = vadd.f32 %v457, %v644
    %v682 = vadd.f32 %v458, %v649
    %v683 = vtanh.pop %v651
    %v684 = vtanh.pop %v652
    %v685 = vtanh.pop %v653
    %v686 = vtanh.pop %v654
    %v687 = vtanh.pop %v655
    %v688 = vtanh.pop %v656
    %v689 = vtanh.pop %v657
    %v690 = vtanh.pop %v658
    %v691 = vtanh.pop %v659
    %v692 = vtanh.pop %v660
    %v693 = vtanh.pop %v661
    %v694 = vtanh.pop %v662
    %v695 = vtanh.pop %v663
    %v696 = vtanh.pop %v664
    %v697 = vtanh.pop %v665
    %v698 = vtanh.pop %v666
    %v699 = vtanh.pop %v667
    %v700 = vtanh.pop %v668
    %v701 = vtanh.pop %v669
    %v702 = vtanh.pop %v670
    %v703 = vtanh.pop %v671
    %v704 = vtanh.pop %v672
    %v705 = vtanh.pop %v673
    %v706 = vtanh.pop %v674
    %v707 = vtanh.pop %v675
    %v708 = vtanh.pop %v676
    %v709 = vtanh.pop %v677
    %v710 = vtanh.pop %v678
    %v711 = vtanh.pop %v679
    %v712 = vtanh.pop %v680
    %v713 = vtanh.pop %v681
    %v714 = vtanh.pop %v682
    %v715 = vld [vmem:[%s3] sm:$0xff]
    %v716 = vld [vmem:[%s3 + $0x8] sm:$0xff]
    %v717 = vld [vmem:[%s3 + $0x10] sm:$0xff]
    %v718 = vld [vmem:[%s3 + $0x18] sm:$0xff]
    %v719 = vld [vmem:[%s3 + $0x20] sm:$0xff]
    %v720 = vld [vmem:[%s3 + $0x28] sm:$0xff]
    %v721 = vld [vmem:[%s3 + $0x30] sm:$0xff]
    %v722 = vld [vmem:[%s3 + $0x38] sm:$0xff]
    %v723 = vld [vmem:[%s3 + $0x40] sm:$0xff]
    %v724 = vld [vmem:[%s3 + $0x48] sm:$0xff]
    %v725 = vld [vmem:[%s3 + $0x50] sm:$0xff]
    %v726 = vld [vmem:[%s3 + $0x58] sm:$0xff]
    %v727 = vld [vmem:[%s3 + $0x60] sm:$0xff]
    %v728 = vld [vmem:[%s3 + $0x68] sm:$0xff]
    %v729 = vld [vmem:[%s3 + $0x70] sm:$0xff]
    %v730 = vld [vmem:[%s3 + $0x78] sm:$0xff]
    %v731 = vld [vmem:[%s3 + $0x80] sm:$0xff]
    %v732 = vld [vmem:[%s3 + $0x88] sm:$0xff]
    %v733 = vld [vmem:[%s3 + $0x90] sm:$0xff]
    %v734 = vld [vmem:[%s3 + $0x98] sm:$0xff]
    %v735 = vld [vmem:[%s3 + $0xa0] sm:$0xff]
    %v736 = vld [vmem:[%s3 + $0xa8] sm:$0xff]
    %v737 = vld [vmem:[%s3 + $0xb0] sm:$0xff]
    %v738 = vld [vmem:[%s3 + $0xb8] sm:$0xff]
    %v739 = vld [vmem:[%s3 + $0xc0] sm:$0xff]
    %v740 = vld [vmem:[%s3 + $0xc8] sm:$0xff]
    %v741 = vld [vmem:[%s3 + $0xd0] sm:$0xff]
    %v742 = vld [vmem:[%s3 + $0xd8] sm:$0xff]
    %v743 = vld [vmem:[%s3 + $0xe0] sm:$0xff]
    %v744 = vld [vmem:[%s3 + $0xe8] sm:$0xff]
    %v745 = vld [vmem:[%s3 + $0xf0] sm:$0xff]
    %v746 = vld [vmem:[%s3 + $0xf8] sm:$0xff]
    %v747 = vpack.c.bf16 %v684, %v683
    %v748 = vpack.c.bf16 %v686, %v685
    %v749 = vpack.c.bf16 %v688, %v687
    %v750 = vpack.c.bf16 %v690, %v689
    %v751 = vpack.c.bf16 %v692, %v691
    %v752 = vpack.c.bf16 %v694, %v693
    %v753 = vpack.c.bf16 %v696, %v695
    %v754 = vpack.c.bf16 %v698, %v697
    %v755 = vpack.c.bf16 %v700, %v699
    %v756 = vpack.c.bf16 %v702, %v701
    %v757 = vpack.c.bf16 %v704, %v703
    %v758 = vpack.c.bf16 %v706, %v705
    %v759 = vpack.c.bf16 %v708, %v707
    %v760 = vpack.c.bf16 %v710, %v709
    %v761 = vpack.c.bf16 %v712, %v711
    %v762 = vpack.c.bf16 %v714, %v713
    %v763 = vld [vmem:[%s4] sm:$0xff]
    %v764 = vld [vmem:[%s4 + $0x8] sm:$0xff]
    %v765 = vld [vmem:[%s4 + $0x10] sm:$0xff]
    %v766 = vld [vmem:[%s4 + $0x18] sm:$0xff]
    %v767 = vld [vmem:[%s4 + $0x20] sm:$0xff]
    %v768 = vld [vmem:[%s4 + $0x28] sm:$0xff]
    %v769 = vld [vmem:[%s4 + $0x30] sm:$0xff]
    %v770 = vld [vmem:[%s4 + $0x38] sm:$0xff]
    %v771 = vld [vmem:[%s4 + $0x40] sm:$0xff]
    %v772 = vld [vmem:[%s4 + $0x48] sm:$0xff]
    %v773 = vld [vmem:[%s4 + $0x50] sm:$0xff]
    %v774 = vld [vmem:[%s4 + $0x58] sm:$0xff]
    %v775 = vld [vmem:[%s4 + $0x60] sm:$0xff]
    %v776 = vld [vmem:[%s4 + $0x68] sm:$0xff]
    %v777 = vld [vmem:[%s4 + $0x70] sm:$0xff]
    %v778 = vld [vmem:[%s4 + $0x78] sm:$0xff]
    %v779 = vld [vmem:[%s4 + $0x80] sm:$0xff]
    %v780 = vld [vmem:[%s4 + $0x88] sm:$0xff]
    %v781 = vld [vmem:[%s4 + $0x90] sm:$0xff]
    %v782 = vld [vmem:[%s4 + $0x98] sm:$0xff]
    %v783 = vld [vmem:[%s4 + $0xa0] sm:$0xff]
    %v784 = vld [vmem:[%s4 + $0xa8] sm:$0xff]
    %v785 = vld [vmem:[%s4 + $0xb0] sm:$0xff]
    %v786 = vld [vmem:[%s4 + $0xb8] sm:$0xff]
    %v787 = vld [vmem:[%s4 + $0xc0] sm:$0xff]
    %v788 = vld [vmem:[%s4 + $0xc8] sm:$0xff]
    %v789 = vld [vmem:[%s4 + $0xd0] sm:$0xff]
    %v790 = vld [vmem:[%s4 + $0xd8] sm:$0xff]
    %v791 = vld [vmem:[%s4 + $0xe0] sm:$0xff]
    %v792 = vld [vmem:[%s4 + $0xe8] sm:$0xff]
    %v793 = vld [vmem:[%s4 + $0xf0] sm:$0xff]
    %v794 = vld [vmem:[%s4 + $0xf8] sm:$0xff]
    %796 = vset.pattern.permute.xlu0 0
    %797 = vperm.xlu0 %796, %v763
    %v798 = vpop.permute.xlu0 %797
    %801 = vset.pattern.permute.xlu0 0
    %802 = vperm.xlu0 %801, %v764
    %v803 = vpop.permute.xlu0 %802
    %806 = vset.pattern.permute.xlu0 0
    %807 = vperm.xlu0 %806, %v765
    %v808 = vpop.permute.xlu0 %807
    %811 = vset.pattern.permute.xlu0 0
    %812 = vperm.xlu0 %811, %v766
    %v813 = vpop.permute.xlu0 %812
    %816 = vset.pattern.permute.xlu0 0
    %817 = vperm.xlu0 %816, %v767
    %v818 = vpop.permute.xlu0 %817
    %821 = vset.pattern.permute.xlu0 0
    %822 = vperm.xlu0 %821, %v768
    %v823 = vpop.permute.xlu0 %822
    %826 = vset.pattern.permute.xlu0 0
    %827 = vperm.xlu0 %826, %v769
    %v828 = vpop.permute.xlu0 %827
    %831 = vset.pattern.permute.xlu0 0
    %832 = vperm.xlu0 %831, %v770
    %v833 = vpop.permute.xlu0 %832
    %836 = vset.pattern.permute.xlu0 0
    %837 = vperm.xlu0 %836, %v771
    %v838 = vpop.permute.xlu0 %837
    %841 = vset.pattern.permute.xlu0 0
    %842 = vperm.xlu0 %841, %v772
    %v843 = vpop.permute.xlu0 %842
    %846 = vset.pattern.permute.xlu0 0
    %847 = vperm.xlu0 %846, %v773
    %v848 = vpop.permute.xlu0 %847
    %851 = vset.pattern.permute.xlu0 0
    %852 = vperm.xlu0 %851, %v774
    %v853 = vpop.permute.xlu0 %852
    %856 = vset.pattern.permute.xlu0 0
    %857 = vperm.xlu0 %856, %v775
    %v858 = vpop.permute.xlu0 %857
    %861 = vset.pattern.permute.xlu0 0
    %862 = vperm.xlu0 %861, %v776
    %v863 = vpop.permute.xlu0 %862
    %866 = vset.pattern.permute.xlu0 0
    %867 = vperm.xlu0 %866, %v777
    %v868 = vpop.permute.xlu0 %867
    %871 = vset.pattern.permute.xlu0 0
    %872 = vperm.xlu0 %871, %v778
    %v873 = vpop.permute.xlu0 %872
    %876 = vset.pattern.permute.xlu0 0
    %877 = vperm.xlu0 %876, %v779
    %v878 = vpop.permute.xlu0 %877
    %881 = vset.pattern.permute.xlu0 0
    %882 = vperm.xlu0 %881, %v780
    %v883 = vpop.permute.xlu0 %882
    %886 = vset.pattern.permute.xlu0 0
    %887 = vperm.xlu0 %886, %v781
    %v888 = vpop.permute.xlu0 %887
    %891 = vset.pattern.permute.xlu0 0
    %892 = vperm.xlu0 %891, %v782
    %v893 = vpop.permute.xlu0 %892
    %896 = vset.pattern.permute.xlu0 0
    %897 = vperm.xlu0 %896, %v783
    %v898 = vpop.permute.xlu0 %897
    %901 = vset.pattern.permute.xlu0 0
    %902 = vperm.xlu0 %901, %v784
    %v903 = vpop.permute.xlu0 %902
    %906 = vset.pattern.permute.xlu0 0
    %907 = vperm.xlu0 %906, %v785
    %v908 = vpop.permute.xlu0 %907
    %911 = vset.pattern.permute.xlu0 0
    %912 = vperm.xlu0 %911, %v786
    %v913 = vpop.permute.xlu0 %912
    %916 = vset.pattern.permute.xlu0 0
    %917 = vperm.xlu0 %916, %v787
    %v918 = vpop.permute.xlu0 %917
    %921 = vset.pattern.permute.xlu0 0
    %922 = vperm.xlu0 %921, %v788
    %v923 = vpop.permute.xlu0 %922
    %926 = vset.pattern.permute.xlu0 0
    %927 = vperm.xlu0 %926, %v789
    %v928 = vpop.permute.xlu0 %927
    %931 = vset.pattern.permute.xlu0 0
    %932 = vperm.xlu0 %931, %v790
    %v933 = vpop.permute.xlu0 %932
    %936 = vset.pattern.permute.xlu0 0
    %937 = vperm.xlu0 %936, %v791
    %v938 = vpop.permute.xlu0 %937
    %941 = vset.pattern.permute.xlu0 0
    %942 = vperm.xlu0 %941, %v792
    %v943 = vpop.permute.xlu0 %942
    %946 = vset.pattern.permute.xlu0 0
    %947 = vperm.xlu0 %946, %v793
    %v948 = vpop.permute.xlu0 %947
    %951 = vset.pattern.permute.xlu0 0
    %952 = vperm.xlu0 %951, %v794
    %v953 = vpop.permute.xlu0 %952
    %v987 = vunpack.c.l.b16 %v715
    %v988 = vunpack.c.h.b16 %v715
    %v989 = vunpack.c.l.b16 %v716
    %v990 = vunpack.c.h.b16 %v716
    %v991 = vunpack.c.l.b16 %v717
    %v992 = vunpack.c.h.b16 %v717
    %v993 = vunpack.c.l.b16 %v718
    %v994 = vunpack.c.h.b16 %v718
    %v995 = vunpack.c.l.b16 %v719
    %v996 = vunpack.c.h.b16 %v719
    %v997 = vunpack.c.l.b16 %v720
    %v998 = vunpack.c.h.b16 %v720
    %v999 = vunpack.c.l.b16 %v721
    %v1000 = vunpack.c.h.b16 %v721
    %v1001 = vunpack.c.l.b16 %v722
    %v1002 = vunpack.c.h.b16 %v722
    %v1003 = vunpack.c.l.b16 %v723
    %v1004 = vunpack.c.h.b16 %v723
    %v1005 = vunpack.c.l.b16 %v724
    %v1006 = vunpack.c.h.b16 %v724
    %v1007 = vunpack.c.l.b16 %v725
    %v1008 = vunpack.c.h.b16 %v725
    %v1009 = vunpack.c.l.b16 %v726
    %v1010 = vunpack.c.h.b16 %v726
    %v1011 = vunpack.c.l.b16 %v727
    %v1012 = vunpack.c.h.b16 %v727
    %v1013 = vunpack.c.l.b16 %v728
    %v1014 = vunpack.c.h.b16 %v728
    %v1015 = vunpack.c.l.b16 %v729
    %v1016 = vunpack.c.h.b16 %v729
    %v1017 = vunpack.c.l.b16 %v730
    %v1018 = vunpack.c.h.b16 %v730
    %v1019 = vunpack.c.l.b16 %v731
    %v1020 = vunpack.c.h.b16 %v731
    %v1021 = vunpack.c.l.b16 %v732
    %v1022 = vunpack.c.h.b16 %v732
    %v1023 = vunpack.c.l.b16 %v733
    %v1024 = vunpack.c.h.b16 %v733
    %v1025 = vunpack.c.l.b16 %v734
    %v1026 = vunpack.c.h.b16 %v734
    %v1027 = vunpack.c.l.b16 %v735
    %v1028 = vunpack.c.h.b16 %v735
    %v1029 = vunpack.c.l.b16 %v736
    %v1030 = vunpack.c.h.b16 %v736
    %v1031 = vunpack.c.l.b16 %v737
    %v1032 = vunpack.c.h.b16 %v737
    %v1033 = vunpack.c.l.b16 %v738
    %v1034 = vunpack.c.h.b16 %v738
    %v1035 = vunpack.c.l.b16 %v739
    %v1036 = vunpack.c.h.b16 %v739
    %v1037 = vunpack.c.l.b16 %v740
    %v1038 = vunpack.c.h.b16 %v740
    %v1039 = vunpack.c.l.b16 %v741
    %v1040 = vunpack.c.h.b16 %v741
    %v1041 = vunpack.c.l.b16 %v742
    %v1042 = vunpack.c.h.b16 %v742
    %v1043 = vunpack.c.l.b16 %v743
    %v1044 = vunpack.c.h.b16 %v743
    %v1045 = vunpack.c.l.b16 %v744
    %v1046 = vunpack.c.h.b16 %v744
    %v1047 = vunpack.c.l.b16 %v745
    %v1048 = vunpack.c.h.b16 %v745
    %v1049 = vunpack.c.l.b16 %v746
    %v1050 = vunpack.c.h.b16 %v746
    %v1051 = vpack.c.b16 %v989, %v987
    %v1052 = vpack.c.b16 %v990, %v988
    %v1053 = vpack.c.b16 %v993, %v991
    %v1054 = vpack.c.b16 %v994, %v992
    %v1055 = vpack.c.b16 %v997, %v995
    %v1056 = vpack.c.b16 %v998, %v996
    %v1057 = vpack.c.b16 %v1001, %v999
    %v1058 = vpack.c.b16 %v1002, %v1000
    %v1059 = vpack.c.b16 %v1005, %v1003
    %v1060 = vpack.c.b16 %v1006, %v1004
    %v1061 = vpack.c.b16 %v1009, %v1007
    %v1062 = vpack.c.b16 %v1010, %v1008
    %v1063 = vpack.c.b16 %v1013, %v1011
    %v1064 = vpack.c.b16 %v1014, %v1012
    %v1065 = vpack.c.b16 %v1017, %v1015
    %v1066 = vpack.c.b16 %v1018, %v1016
    %v1067 = vpack.c.b16 %v1021, %v1019
    %v1068 = vpack.c.b16 %v1022, %v1020
    %v1069 = vpack.c.b16 %v1025, %v1023
    %v1070 = vpack.c.b16 %v1026, %v1024
    %v1071 = vpack.c.b16 %v1029, %v1027
    %v1072 = vpack.c.b16 %v1030, %v1028
    %v1073 = vpack.c.b16 %v1033, %v1031
    %v1074 = vpack.c.b16 %v1034, %v1032
    %v1075 = vpack.c.b16 %v1037, %v1035
    %v1076 = vpack.c.b16 %v1038, %v1036
    %v1077 = vpack.c.b16 %v1041, %v1039
    %v1078 = vpack.c.b16 %v1042, %v1040
    %v1079 = vpack.c.b16 %v1045, %v1043
    %v1080 = vpack.c.b16 %v1046, %v1044
    %v1081 = vpack.c.b16 %v1049, %v1047
    %v1082 = vpack.c.b16 %v1050, %v1048
    %1115 = vmatprep.subr.bf16.mxu0 0
    %1116 = vmatpush1.bf16.msra.mxu0 %v747
    %1117 = vmatprep.subr.bf16.mxu0 0
    %1118 = vmatpush1.bf16.msra.mxu0 %v748
    %1119 = vmatprep.subr.bf16.mxu0 0
    %1120 = vmatpush1.bf16.msra.mxu0 %v749
    %1121 = vmatprep.subr.bf16.mxu0 0
    %1122 = vmatpush1.bf16.msra.mxu0 %v750
    %1123 = vmatprep.subr.bf16.mxu0 0
    %1124 = vmatpush1.bf16.msra.mxu0 %v751
    %1125 = vmatprep.subr.bf16.mxu0 0
    %1126 = vmatpush1.bf16.msra.mxu0 %v752
    %1127 = vmatprep.subr.bf16.mxu0 0
    %1128 = vmatpush1.bf16.msra.mxu0 %v753
    %1129 = vmatprep.subr.bf16.mxu0 0
    %1130 = vmatpush1.bf16.msra.mxu0 %v754
    %1131 = vmatprep.subr.bf16.mxu0 0
    %1132 = vmatpush1.bf16.msra.mxu0 %v755
    %1133 = vmatprep.subr.bf16.mxu0 0
    %1134 = vmatpush1.bf16.msra.mxu0 %v756
    %1135 = vmatprep.subr.bf16.mxu0 0
    %1136 = vmatpush1.bf16.msra.mxu0 %v757
    %1137 = vmatprep.subr.bf16.mxu0 0
    %1138 = vmatpush1.bf16.msra.mxu0 %v758
    %1139 = vmatprep.subr.bf16.mxu0 0
    %1140 = vmatpush1.bf16.msra.mxu0 %v759
    %1141 = vmatprep.subr.bf16.mxu0 0
    %1142 = vmatpush1.bf16.msra.mxu0 %v760
    %1143 = vmatprep.subr.bf16.mxu0 0
    %1144 = vmatpush1.bf16.msra.mxu0 %v761
    %1145 = vmatprep.subr.bf16.mxu0 0
    %1146 = vmatpush1.bf16.msra.mxu0 %v762
    %1147 = vmatprep.mubr.bf16.mxu0 %v1052
    %1148 = vmatmul.mubr.bf16.gmra.mrb[0].mxu0 %v1051
    %v1149 = vpop.f32.mrb[0].mxu0
    %v1150 = vadd.f32 %v798, %v1149
    %v1151 = vpop.f32.mrb[0].mxu0
    %v1152 = vpop.f32.mrb[0].mxu0
    %v1153 = vadd.f32 %v803, %v1152
    %v1154 = vpop.f32.mrb[0].mxu0
    %1155 = vmatprep.mubr.bf16.mxu0 %v1054
    %1156 = vmatmul.mubr.bf16.gmra.mrb[0].mxu0 %v1053
    %v1157 = vpop.f32.mrb[0].mxu0
    %v1158 = vadd.f32 %v808, %v1157
    %v1159 = vpop.f32.mrb[0].mxu0
    %v1160 = vpop.f32.mrb[0].mxu0
    %v1161 = vadd.f32 %v813, %v1160
    %v1162 = vpop.f32.mrb[0].mxu0
    %1163 = vmatprep.mubr.bf16.mxu0 %v1056
    %1164 = vmatmul.mubr.bf16.gmra.mrb[0].mxu0 %v1055
    %v1165 = vpop.f32.mrb[0].mxu0
    %v1166 = vadd.f32 %v818, %v1165
    %v1167 = vpop.f32.mrb[0].mxu0
    %v1168 = vpop.f32.mrb[0].mxu0
    %v1169 = vadd.f32 %v823, %v1168
    %v1170 = vpop.f32.mrb[0].mxu0
    %1171 = vmatprep.mubr.bf16.mxu0 %v1058
    %1172 = vmatmul.mubr.bf16.gmra.mrb[0].mxu0 %v1057
    %v1173 = vpop.f32.mrb[0].mxu0
    %v1174 = vadd.f32 %v828, %v1173
    %v1175 = vpop.f32.mrb[0].mxu0
    %v1176 = vpop.f32.mrb[0].mxu0
    %v1177 = vadd.f32 %v833, %v1176
    %v1178 = vpop.f32.mrb[0].mxu0
    %1179 = vmatprep.mubr.bf16.mxu0 %v1060
    %1180 = vmatmul.mubr.bf16.gmra.mrb[0].mxu0 %v1059
    %v1181 = vpop.f32.mrb[0].mxu0
    %v1182 = vadd.f32 %v838, %v1181
    %v1183 = vpop.f32.mrb[0].mxu0
    %v1184 = vpop.f32.mrb[0].mxu0
    %v1185 = vadd.f32 %v843, %v1184
    %v1186 = vpop.f32.mrb[0].mxu0
    %1187 = vmatprep.mubr.bf16.mxu0 %v1062
    %1188 = vmatmul.mubr.bf16.gmra.mrb[0].mxu0 %v1061
    %v1189 = vpop.f32.mrb[0].mxu0
    %v1190 = vadd.f32 %v848, %v1189
    %v1191 = vpop.f32.mrb[0].mxu0
    %v1192 = vpop.f32.mrb[0].mxu0
    %v1193 = vadd.f32 %v853, %v1192
    %v1194 = vpop.f32.mrb[0].mxu0
    %1195 = vmatprep.mubr.bf16.mxu0 %v1064
    %1196 = vmatmul.mubr.bf16.gmra.mrb[0].mxu0 %v1063
    %v1197 = vpop.f32.mrb[0].mxu0
    %v1198 = vadd.f32 %v858, %v1197
    %v1199 = vpop.f32.mrb[0].mxu0
    %v1200 = vpop.f32.mrb[0].mxu0
    %v1201 = vadd.f32 %v863, %v1200
    %v1202 = vpop.f32.mrb[0].mxu0
    %1203 = vmatprep.mubr.bf16.mxu0 %v1066
    %1204 = vmatmul.mubr.bf16.gmra.mrb[0].mxu0 %v1065
    %v1205 = vpop.f32.mrb[0].mxu0
    %v1206 = vadd.f32 %v868, %v1205
    %v1207 = vpop.f32.mrb[0].mxu0
    %v1208 = vpop.f32.mrb[0].mxu0
    %v1209 = vadd.f32 %v873, %v1208
    %v1210 = vpop.f32.mrb[0].mxu0
    %1211 = vmatprep.mubr.bf16.mxu0 %v1068
    %1212 = vmatmul.mubr.bf16.gmra.mrb[0].mxu0 %v1067
    %v1213 = vpop.f32.mrb[0].mxu0
    %v1214 = vadd.f32 %v878, %v1213
    %v1215 = vpop.f32.mrb[0].mxu0
    %v1216 = vpop.f32.mrb[0].mxu0
    %v1217 = vadd.f32 %v883, %v1216
    %v1218 = vpop.f32.mrb[0].mxu0
    %1219 = vmatprep.mubr.bf16.mxu0 %v1070
    %1220 = vmatmul.mubr.bf16.gmra.mrb[0].mxu0 %v1069
    %v1221 = vpop.f32.mrb[0].mxu0
    %v1222 = vadd.f32 %v888, %v1221
    %v1223 = vpop.f32.mrb[0].mxu0
    %v1224 = vpop.f32.mrb[0].mxu0
    %v1225 = vadd.f32 %v893, %v1224
    %v1226 = vpop.f32.mrb[0].mxu0
    %1227 = vmatprep.mubr.bf16.mxu0 %v1072
    %1228 = vmatmul.mubr.bf16.gmra.mrb[0].mxu0 %v1071
    %v1229 = vpop.f32.mrb[0].mxu0
    %v1230 = vadd.f32 %v898, %v1229
    %v1231 = vpop.f32.mrb[0].mxu0
    %v1232 = vpop.f32.mrb[0].mxu0
    %v1233 = vadd.f32 %v903, %v1232
    %v1234 = vpop.f32.mrb[0].mxu0
    %1235 = vmatprep.mubr.bf16.mxu0 %v1074
    %1236 = vmatmul.mubr.bf16.gmra.mrb[0].mxu0 %v1073
    %v1237 = vpop.f32.mrb[0].mxu0
    %v1238 = vadd.f32 %v908, %v1237
    %v1239 = vpop.f32.mrb[0].mxu0
    %v1240 = vpop.f32.mrb[0].mxu0
    %v1241 = vadd.f32 %v913, %v1240
    %v1242 = vpop.f32.mrb[0].mxu0
    %1243 = vmatprep.mubr.bf16.mxu0 %v1076
    %1244 = vmatmul.mubr.bf16.gmra.mrb[0].mxu0 %v1075
    %v1245 = vpop.f32.mrb[0].mxu0
    %v1246 = vadd.f32 %v918, %v1245
    %v1247 = vpop.f32.mrb[0].mxu0
    %v1248 = vpop.f32.mrb[0].mxu0
    %v1249 = vadd.f32 %v923, %v1248
    %v1250 = vpop.f32.mrb[0].mxu0
    %1251 = vmatprep.mubr.bf16.mxu0 %v1078
    %1252 = vmatmul.mubr.bf16.gmra.mrb[0].mxu0 %v1077
    %v1253 = vpop.f32.mrb[0].mxu0
    %v1254 = vadd.f32 %v928, %v1253
    %v1255 = vpop.f32.mrb[0].mxu0
    %v1256 = vpop.f32.mrb[0].mxu0
    %v1257 = vadd.f32 %v933, %v1256
    %v1258 = vpop.f32.mrb[0].mxu0
    %1259 = vmatprep.mubr.bf16.mxu0 %v1080
    %1260 = vmatmul.mubr.bf16.gmra.mrb[0].mxu0 %v1079
    %v1261 = vpop.f32.mrb[0].mxu0
    %v1262 = vadd.f32 %v938, %v1261
    %v1263 = vpop.f32.mrb[0].mxu0
    %v1264 = vpop.f32.mrb[0].mxu0
    %v1265 = vadd.f32 %v943, %v1264
    %v1266 = vpop.f32.mrb[0].mxu0
    %1267 = vmatprep.mubr.bf16.mxu0 %v1082
    %1268 = vmatmul.mubr.bf16.gmra.mrb[0].mxu0 %v1081
    %v1269 = vpop.f32.mrb[0].mxu0
    %v1270 = vadd.f32 %v948, %v1269
    %v1271 = vpop.f32.mrb[0].mxu0
    %v1272 = vpop.f32.mrb[0].mxu0
    %v1273 = vadd.f32 %v953, %v1272
    %v1274 = vpop.f32.mrb[0].mxu0
    %1275 = vdwg.mxu0
    %v1276 = vtanh.pop %v1150
    %v1277 = vtanh.pop %v1153
    %v1278 = vtanh.pop %v1158
    %v1279 = vtanh.pop %v1161
    %v1280 = vtanh.pop %v1166
    %v1281 = vtanh.pop %v1169
    %v1282 = vtanh.pop %v1174
    %v1283 = vtanh.pop %v1177
    %v1284 = vtanh.pop %v1182
    %v1285 = vtanh.pop %v1185
    %v1286 = vtanh.pop %v1190
    %v1287 = vtanh.pop %v1193
    %v1288 = vtanh.pop %v1198
    %v1289 = vtanh.pop %v1201
    %v1290 = vtanh.pop %v1206
    %v1291 = vtanh.pop %v1209
    %v1292 = vtanh.pop %v1214
    %v1293 = vtanh.pop %v1217
    %v1294 = vtanh.pop %v1222
    %v1295 = vtanh.pop %v1225
    %v1296 = vtanh.pop %v1230
    %v1297 = vtanh.pop %v1233
    %v1298 = vtanh.pop %v1238
    %v1299 = vtanh.pop %v1241
    %v1300 = vtanh.pop %v1246
    %v1301 = vtanh.pop %v1249
    %v1302 = vtanh.pop %v1254
    %v1303 = vtanh.pop %v1257
    %v1304 = vtanh.pop %v1262
    %v1305 = vtanh.pop %v1265
    %v1306 = vtanh.pop %v1270
    %v1307 = vtanh.pop %v1273
    %v1308 = vld [vmem:[%s5] sm:$0xff]
    %v1309 = vld [vmem:[%s5 + $0x8] sm:$0xff]
    %v1310 = vld [vmem:[%s5 + $0x10] sm:$0xff]
    %v1311 = vld [vmem:[%s5 + $0x18] sm:$0xff]
    %v1312 = vld [vmem:[%s5 + $0x20] sm:$0xff]
    %v1313 = vld [vmem:[%s5 + $0x28] sm:$0xff]
    %v1314 = vld [vmem:[%s5 + $0x30] sm:$0xff]
    %v1315 = vld [vmem:[%s5 + $0x38] sm:$0xff]
    %v1316 = vld [vmem:[%s5 + $0x40] sm:$0xff]
    %v1317 = vld [vmem:[%s5 + $0x48] sm:$0xff]
    %v1318 = vld [vmem:[%s5 + $0x50] sm:$0xff]
    %v1319 = vld [vmem:[%s5 + $0x58] sm:$0xff]
    %v1320 = vld [vmem:[%s5 + $0x60] sm:$0xff]
    %v1321 = vld [vmem:[%s5 + $0x68] sm:$0xff]
    %v1322 = vld [vmem:[%s5 + $0x70] sm:$0xff]
    %v1323 = vld [vmem:[%s5 + $0x78] sm:$0xff]
    %v1324 = vld [vmem:[%s5 + $0x80] sm:$0xff]
    %v1325 = vld [vmem:[%s5 + $0x88] sm:$0xff]
    %v1326 = vld [vmem:[%s5 + $0x90] sm:$0xff]
    %v1327 = vld [vmem:[%s5 + $0x98] sm:$0xff]
    %v1328 = vld [vmem:[%s5 + $0xa0] sm:$0xff]
    %v1329 = vld [vmem:[%s5 + $0xa8] sm:$0xff]
    %v1330 = vld [vmem:[%s5 + $0xb0] sm:$0xff]
    %v1331 = vld [vmem:[%s5 + $0xb8] sm:$0xff]
    %v1332 = vld [vmem:[%s5 + $0xc0] sm:$0xff]
    %v1333 = vld [vmem:[%s5 + $0xc8] sm:$0xff]
    %v1334 = vld [vmem:[%s5 + $0xd0] sm:$0xff]
    %v1335 = vld [vmem:[%s5 + $0xd8] sm:$0xff]
    %v1336 = vld [vmem:[%s5 + $0xe0] sm:$0xff]
    %v1337 = vld [vmem:[%s5 + $0xe8] sm:$0xff]
    %v1338 = vld [vmem:[%s5 + $0xf0] sm:$0xff]
    %v1339 = vld [vmem:[%s5 + $0xf8] sm:$0xff]
    %v1340 = vpack.c.bf16 %v1277, %v1276
    %v1341 = vpack.c.bf16 %v1279, %v1278
    %v1342 = vpack.c.bf16 %v1281, %v1280
    %v1343 = vpack.c.bf16 %v1283, %v1282
    %v1344 = vpack.c.bf16 %v1285, %v1284
    %v1345 = vpack.c.bf16 %v1287, %v1286
    %v1346 = vpack.c.bf16 %v1289, %v1288
    %v1347 = vpack.c.bf16 %v1291, %v1290
    %v1348 = vpack.c.bf16 %v1293, %v1292
    %v1349 = vpack.c.bf16 %v1295, %v1294
    %v1350 = vpack.c.bf16 %v1297, %v1296
    %v1351 = vpack.c.bf16 %v1299, %v1298
    %v1352 = vpack.c.bf16 %v1301, %v1300
    %v1353 = vpack.c.bf16 %v1303, %v1302
    %v1354 = vpack.c.bf16 %v1305, %v1304
    %v1355 = vpack.c.bf16 %v1307, %v1306
    %v1356 = vld [vmem:[%s6] sm:$0xff]
    %v1357 = vld [vmem:[%s6 + $0x8] sm:$0xff]
    %v1358 = vld [vmem:[%s6 + $0x10] sm:$0xff]
    %v1359 = vld [vmem:[%s6 + $0x18] sm:$0xff]
    %v1360 = vld [vmem:[%s6 + $0x20] sm:$0xff]
    %v1361 = vld [vmem:[%s6 + $0x28] sm:$0xff]
    %v1362 = vld [vmem:[%s6 + $0x30] sm:$0xff]
    %v1363 = vld [vmem:[%s6 + $0x38] sm:$0xff]
    %v1364 = vld [vmem:[%s6 + $0x40] sm:$0xff]
    %v1365 = vld [vmem:[%s6 + $0x48] sm:$0xff]
    %v1366 = vld [vmem:[%s6 + $0x50] sm:$0xff]
    %v1367 = vld [vmem:[%s6 + $0x58] sm:$0xff]
    %v1368 = vld [vmem:[%s6 + $0x60] sm:$0xff]
    %v1369 = vld [vmem:[%s6 + $0x68] sm:$0xff]
    %v1370 = vld [vmem:[%s6 + $0x70] sm:$0xff]
    %v1371 = vld [vmem:[%s6 + $0x78] sm:$0xff]
    %v1372 = vld [vmem:[%s6 + $0x80] sm:$0xff]
    %v1373 = vld [vmem:[%s6 + $0x88] sm:$0xff]
    %v1374 = vld [vmem:[%s6 + $0x90] sm:$0xff]
    %v1375 = vld [vmem:[%s6 + $0x98] sm:$0xff]
    %v1376 = vld [vmem:[%s6 + $0xa0] sm:$0xff]
    %v1377 = vld [vmem:[%s6 + $0xa8] sm:$0xff]
    %v1378 = vld [vmem:[%s6 + $0xb0] sm:$0xff]
    %v1379 = vld [vmem:[%s6 + $0xb8] sm:$0xff]
    %v1380 = vld [vmem:[%s6 + $0xc0] sm:$0xff]
    %v1381 = vld [vmem:[%s6 + $0xc8] sm:$0xff]
    %v1382 = vld [vmem:[%s6 + $0xd0] sm:$0xff]
    %v1383 = vld [vmem:[%s6 + $0xd8] sm:$0xff]
    %v1384 = vld [vmem:[%s6 + $0xe0] sm:$0xff]
    %v1385 = vld [vmem:[%s6 + $0xe8] sm:$0xff]
    %v1386 = vld [vmem:[%s6 + $0xf0] sm:$0xff]
    %v1387 = vld [vmem:[%s6 + $0xf8] sm:$0xff]
    %1389 = vset.pattern.permute.xlu0 0
    %1390 = vperm.xlu0 %1389, %v1356
    %v1391 = vpop.permute.xlu0 %1390
    %1394 = vset.pattern.permute.xlu0 0
    %1395 = vperm.xlu0 %1394, %v1357
    %v1396 = vpop.permute.xlu0 %1395
    %1399 = vset.pattern.permute.xlu0 0
    %1400 = vperm.xlu0 %1399, %v1358
    %v1401 = vpop.permute.xlu0 %1400
    %1404 = vset.pattern.permute.xlu0 0
    %1405 = vperm.xlu0 %1404, %v1359
    %v1406 = vpop.permute.xlu0 %1405
    %1409 = vset.pattern.permute.xlu0 0
    %1410 = vperm.xlu0 %1409, %v1360
    %v1411 = vpop.permute.xlu0 %1410
    %1414 = vset.pattern.permute.xlu0 0
    %1415 = vperm.xlu0 %1414, %v1361
    %v1416 = vpop.permute.xlu0 %1415
    %1419 = vset.pattern.permute.xlu0 0
    %1420 = vperm.xlu0 %1419, %v1362
    %v1421 = vpop.permute.xlu0 %1420
    %1424 = vset.pattern.permute.xlu0 0
    %1425 = vperm.xlu0 %1424, %v1363
    %v1426 = vpop.permute.xlu0 %1425
    %1429 = vset.pattern.permute.xlu0 0
    %1430 = vperm.xlu0 %1429, %v1364
    %v1431 = vpop.permute.xlu0 %1430
    %1434 = vset.pattern.permute.xlu0 0
    %1435 = vperm.xlu0 %1434, %v1365
    %v1436 = vpop.permute.xlu0 %1435
    %1439 = vset.pattern.permute.xlu0 0
    %1440 = vperm.xlu0 %1439, %v1366
    %v1441 = vpop.permute.xlu0 %1440
    %1444 = vset.pattern.permute.xlu0 0
    %1445 = vperm.xlu0 %1444, %v1367
    %v1446 = vpop.permute.xlu0 %1445
    %1449 = vset.pattern.permute.xlu0 0
    %1450 = vperm.xlu0 %1449, %v1368
    %v1451 = vpop.permute.xlu0 %1450
    %1454 = vset.pattern.permute.xlu0 0
    %1455 = vperm.xlu0 %1454, %v1369
    %v1456 = vpop.permute.xlu0 %1455
    %1459 = vset.pattern.permute.xlu0 0
    %1460 = vperm.xlu0 %1459, %v1370
    %v1461 = vpop.permute.xlu0 %1460
    %1464 = vset.pattern.permute.xlu0 0
    %1465 = vperm.xlu0 %1464, %v1371
    %v1466 = vpop.permute.xlu0 %1465
    %1469 = vset.pattern.permute.xlu0 0
    %1470 = vperm.xlu0 %1469, %v1372
    %v1471 = vpop.permute.xlu0 %1470
    %1474 = vset.pattern.permute.xlu0 0
    %1475 = vperm.xlu0 %1474, %v1373
    %v1476 = vpop.permute.xlu0 %1475
    %1479 = vset.pattern.permute.xlu0 0
    %1480 = vperm.xlu0 %1479, %v1374
    %v1481 = vpop.permute.xlu0 %1480
    %1484 = vset.pattern.permute.xlu0 0
    %1485 = vperm.xlu0 %1484, %v1375
    %v1486 = vpop.permute.xlu0 %1485
    %1489 = vset.pattern.permute.xlu0 0
    %1490 = vperm.xlu0 %1489, %v1376
    %v1491 = vpop.permute.xlu0 %1490
    %1494 = vset.pattern.permute.xlu0 0
    %1495 = vperm.xlu0 %1494, %v1377
    %v1496 = vpop.permute.xlu0 %1495
    %1499 = vset.pattern.permute.xlu0 0
    %1500 = vperm.xlu0 %1499, %v1378
    %v1501 = vpop.permute.xlu0 %1500
    %1504 = vset.pattern.permute.xlu0 0
    %1505 = vperm.xlu0 %1504, %v1379
    %v1506 = vpop.permute.xlu0 %1505
    %1509 = vset.pattern.permute.xlu0 0
    %1510 = vperm.xlu0 %1509, %v1380
    %v1511 = vpop.permute.xlu0 %1510
    %1514 = vset.pattern.permute.xlu0 0
    %1515 = vperm.xlu0 %1514, %v1381
    %v1516 = vpop.permute.xlu0 %1515
    %1519 = vset.pattern.permute.xlu0 0
    %1520 = vperm.xlu0 %1519, %v1382
    %v1521 = vpop.permute.xlu0 %1520
    %1524 = vset.pattern.permute.xlu0 0
    %1525 = vperm.xlu0 %1524, %v1383
    %v1526 = vpop.permute.xlu0 %1525
    %1529 = vset.pattern.permute.xlu0 0
    %1530 = vperm.xlu0 %1529, %v1384
    %v1531 = vpop.permute.xlu0 %1530
    %1534 = vset.pattern.permute.xlu0 0
    %1535 = vperm.xlu0 %1534, %v1385
    %v1536 = vpop.permute.xlu0 %1535
    %1539 = vset.pattern.permute.xlu0 0
    %1540 = vperm.xlu0 %1539, %v1386
    %v1541 = vpop.permute.xlu0 %1540
    %1544 = vset.pattern.permute.xlu0 0
    %1545 = vperm.xlu0 %1544, %v1387
    %v1546 = vpop.permute.xlu0 %1545
    %v1580 = vunpack.c.l.b16 %v1308
    %v1581 = vunpack.c.h.b16 %v1308
    %v1582 = vunpack.c.l.b16 %v1309
    %v1583 = vunpack.c.h.b16 %v1309
    %v1584 = vunpack.c.l.b16 %v1310
    %v1585 = vunpack.c.h.b16 %v1310
    %v1586 = vunpack.c.l.b16 %v1311
    %v1587 = vunpack.c.h.b16 %v1311
    %v1588 = vunpack.c.l.b16 %v1312
    %v1589 = vunpack.c.h.b16 %v1312
    %v1590 = vunpack.c.l.b16 %v1313
    %v1591 = vunpack.c.h.b16 %v1313
    %v1592 = vunpack.c.l.b16 %v1314
    %v1593 = vunpack.c.h.b16 %v1314
    %v1594 = vunpack.c.l.b16 %v1315
    %v1595 = vunpack.c.h.b16 %v1315
    %v1596 = vunpack.c.l.b16 %v1316
    %v1597 = vunpack.c.h.b16 %v1316
    %v1598 = vunpack.c.l.b16 %v1317
    %v1599 = vunpack.c.h.b16 %v1317
    %v1600 = vunpack.c.l.b16 %v1318
    %v1601 = vunpack.c.h.b16 %v1318
    %v1602 = vunpack.c.l.b16 %v1319
    %v1603 = vunpack.c.h.b16 %v1319
    %v1604 = vunpack.c.l.b16 %v1320
    %v1605 = vunpack.c.h.b16 %v1320
    %v1606 = vunpack.c.l.b16 %v1321
    %v1607 = vunpack.c.h.b16 %v1321
    %v1608 = vunpack.c.l.b16 %v1322
    %v1609 = vunpack.c.h.b16 %v1322
    %v1610 = vunpack.c.l.b16 %v1323
    %v1611 = vunpack.c.h.b16 %v1323
    %v1612 = vunpack.c.l.b16 %v1324
    %v1613 = vunpack.c.h.b16 %v1324
    %v1614 = vunpack.c.l.b16 %v1325
    %v1615 = vunpack.c.h.b16 %v1325
    %v1616 = vunpack.c.l.b16 %v1326
    %v1617 = vunpack.c.h.b16 %v1326
    %v1618 = vunpack.c.l.b16 %v1327
    %v1619 = vunpack.c.h.b16 %v1327
    %v1620 = vunpack.c.l.b16 %v1328
    %v1621 = vunpack.c.h.b16 %v1328
    %v1622 = vunpack.c.l.b16 %v1329
    %v1623 = vunpack.c.h.b16 %v1329
    %v1624 = vunpack.c.l.b16 %v1330
    %v1625 = vunpack.c.h.b16 %v1330
    %v1626 = vunpack.c.l.b16 %v1331
    %v1627 = vunpack.c.h.b16 %v1331
    %v1628 = vunpack.c.l.b16 %v1332
    %v1629 = vunpack.c.h.b16 %v1332
    %v1630 = vunpack.c.l.b16 %v1333
    %v1631 = vunpack.c.h.b16 %v1333
    %v1632 = vunpack.c.l.b16 %v1334
    %v1633 = vunpack.c.h.b16 %v1334
    %v1634 = vunpack.c.l.b16 %v1335
    %v1635 = vunpack.c.h.b16 %v1335
    %v1636 = vunpack.c.l.b16 %v1336
    %v1637 = vunpack.c.h.b16 %v1336
    %v1638 = vunpack.c.l.b16 %v1337
    %v1639 = vunpack.c.h.b16 %v1337
    %v1640 = vunpack.c.l.b16 %v1338
    %v1641 = vunpack.c.h.b16 %v1338
    %v1642 = vunpack.c.l.b16 %v1339
    %v1643 = vunpack.c.h.b16 %v1339
    %v1644 = vpack.c.b16 %v1582, %v1580
    %v1645 = vpack.c.b16 %v1583, %v1581
    %v1646 = vpack.c.b16 %v1586, %v1584
    %v1647 = vpack.c.b16 %v1587, %v1585
    %v1648 = vpack.c.b16 %v1590, %v1588
    %v1649 = vpack.c.b16 %v1591, %v1589
    %v1650 = vpack.c.b16 %v1594, %v1592
    %v1651 = vpack.c.b16 %v1595, %v1593
    %v1652 = vpack.c.b16 %v1598, %v1596
    %v1653 = vpack.c.b16 %v1599, %v1597
    %v1654 = vpack.c.b16 %v1602, %v1600
    %v1655 = vpack.c.b16 %v1603, %v1601
    %v1656 = vpack.c.b16 %v1606, %v1604
    %v1657 = vpack.c.b16 %v1607, %v1605
    %v1658 = vpack.c.b16 %v1610, %v1608
    %v1659 = vpack.c.b16 %v1611, %v1609
    %v1660 = vpack.c.b16 %v1614, %v1612
    %v1661 = vpack.c.b16 %v1615, %v1613
    %v1662 = vpack.c.b16 %v1618, %v1616
    %v1663 = vpack.c.b16 %v1619, %v1617
    %v1664 = vpack.c.b16 %v1622, %v1620
    %v1665 = vpack.c.b16 %v1623, %v1621
    %v1666 = vpack.c.b16 %v1626, %v1624
    %v1667 = vpack.c.b16 %v1627, %v1625
    %v1668 = vpack.c.b16 %v1630, %v1628
    %v1669 = vpack.c.b16 %v1631, %v1629
    %v1670 = vpack.c.b16 %v1634, %v1632
    %v1671 = vpack.c.b16 %v1635, %v1633
    %v1672 = vpack.c.b16 %v1638, %v1636
    %v1673 = vpack.c.b16 %v1639, %v1637
    %v1674 = vpack.c.b16 %v1642, %v1640
    %v1675 = vpack.c.b16 %v1643, %v1641
    %1708 = vmatprep.subr.bf16.mxu0 0
    %1709 = vmatpush1.bf16.msra.mxu0 %v1340
    %1710 = vmatprep.subr.bf16.mxu0 0
    %1711 = vmatpush1.bf16.msra.mxu0 %v1341
    %1712 = vmatprep.subr.bf16.mxu0 0
    %1713 = vmatpush1.bf16.msra.mxu0 %v1342
    %1714 = vmatprep.subr.bf16.mxu0 0
    %1715 = vmatpush1.bf16.msra.mxu0 %v1343
    %1716 = vmatprep.subr.bf16.mxu0 0
    %1717 = vmatpush1.bf16.msra.mxu0 %v1344
    %1718 = vmatprep.subr.bf16.mxu0 0
    %1719 = vmatpush1.bf16.msra.mxu0 %v1345
    %1720 = vmatprep.subr.bf16.mxu0 0
    %1721 = vmatpush1.bf16.msra.mxu0 %v1346
    %1722 = vmatprep.subr.bf16.mxu0 0
    %1723 = vmatpush1.bf16.msra.mxu0 %v1347
    %1724 = vmatprep.subr.bf16.mxu0 0
    %1725 = vmatpush1.bf16.msra.mxu0 %v1348
    %1726 = vmatprep.subr.bf16.mxu0 0
    %1727 = vmatpush1.bf16.msra.mxu0 %v1349
    %1728 = vmatprep.subr.bf16.mxu0 0
    %1729 = vmatpush1.bf16.msra.mxu0 %v1350
    %1730 = vmatprep.subr.bf16.mxu0 0
    %1731 = vmatpush1.bf16.msra.mxu0 %v1351
    %1732 = vmatprep.subr.bf16.mxu0 0
    %1733 = vmatpush1.bf16.msra.mxu0 %v1352
    %1734 = vmatprep.subr.bf16.mxu0 0
    %1735 = vmatpush1.bf16.msra.mxu0 %v1353
    %1736 = vmatprep.subr.bf16.mxu0 0
    %1737 = vmatpush1.bf16.msra.mxu0 %v1354
    %1738 = vmatprep.subr.bf16.mxu0 0
    %1739 = vmatpush1.bf16.msra.mxu0 %v1355
    %1740 = vmatprep.mubr.bf16.mxu0 %v1645
    %1741 = vmatmul.mubr.bf16.gmra.mrb[0].mxu0 %v1644
    %v1742 = vpop.f32.mrb[0].mxu0
    %v1743 = vadd.f32 %v1391, %v1742
    %v1744 = vpop.f32.mrb[0].mxu0
    %v1745 = vpop.f32.mrb[0].mxu0
    %v1746 = vadd.f32 %v1396, %v1745
    %v1747 = vpop.f32.mrb[0].mxu0
    %1748 = vmatprep.mubr.bf16.mxu0 %v1647
    %1749 = vmatmul.mubr.bf16.gmra.mrb[0].mxu0 %v1646
    %v1750 = vpop.f32.mrb[0].mxu0
    %v1751 = vadd.f32 %v1401, %v1750
    %v1752 = vpop.f32.mrb[0].mxu0
    %v1753 = vpop.f32.mrb[0].mxu0
    %v1754 = vadd.f32 %v1406, %v1753
    %v1755 = vpop.f32.mrb[0].mxu0
    %1756 = vmatprep.mubr.bf16.mxu0 %v1649
    %1757 = vmatmul.mubr.bf16.gmra.mrb[0].mxu0 %v1648
    %v1758 = vpop.f32.mrb[0].mxu0
    %v1759 = vadd.f32 %v1411, %v1758
    %v1760 = vpop.f32.mrb[0].mxu0
    %v1761 = vpop.f32.mrb[0].mxu0
    %v1762 = vadd.f32 %v1416, %v1761
    %v1763 = vpop.f32.mrb[0].mxu0
    %1764 = vmatprep.mubr.bf16.mxu0 %v1651
    %1765 = vmatmul.mubr.bf16.gmra.mrb[0].mxu0 %v1650
    %v1766 = vpop.f32.mrb[0].mxu0
    %v1767 = vadd.f32 %v1421, %v1766
    %v1768 = vpop.f32.mrb[0].mxu0
    %v1769 = vpop.f32.mrb[0].mxu0
    %v1770 = vadd.f32 %v1426, %v1769
    %v1771 = vpop.f32.mrb[0].mxu0
    %1772 = vmatprep.mubr.bf16.mxu0 %v1653
    %1773 = vmatmul.mubr.bf16.gmra.mrb[0].mxu0 %v1652
    %v1774 = vpop.f32.mrb[0].mxu0
    %v1775 = vadd.f32 %v1431, %v1774
    %v1776 = vpop.f32.mrb[0].mxu0
    %v1777 = vpop.f32.mrb[0].mxu0
    %v1778 = vadd.f32 %v1436, %v1777
    %v1779 = vpop.f32.mrb[0].mxu0
    %1780 = vmatprep.mubr.bf16.mxu0 %v1655
    %1781 = vmatmul.mubr.bf16.gmra.mrb[0].mxu0 %v1654
    %v1782 = vpop.f32.mrb[0].mxu0
    %v1783 = vadd.f32 %v1441, %v1782
    %v1784 = vpop.f32.mrb[0].mxu0
    %v1785 = vpop.f32.mrb[0].mxu0
    %v1786 = vadd.f32 %v1446, %v1785
    %v1787 = vpop.f32.mrb[0].mxu0
    %1788 = vmatprep.mubr.bf16.mxu0 %v1657
    %1789 = vmatmul.mubr.bf16.gmra.mrb[0].mxu0 %v1656
    %v1790 = vpop.f32.mrb[0].mxu0
    %v1791 = vadd.f32 %v1451, %v1790
    %v1792 = vpop.f32.mrb[0].mxu0
    %v1793 = vpop.f32.mrb[0].mxu0
    %v1794 = vadd.f32 %v1456, %v1793
    %v1795 = vpop.f32.mrb[0].mxu0
    %1796 = vmatprep.mubr.bf16.mxu0 %v1659
    %1797 = vmatmul.mubr.bf16.gmra.mrb[0].mxu0 %v1658
    %v1798 = vpop.f32.mrb[0].mxu0
    %v1799 = vadd.f32 %v1461, %v1798
    %v1800 = vpop.f32.mrb[0].mxu0
    %v1801 = vpop.f32.mrb[0].mxu0
    %v1802 = vadd.f32 %v1466, %v1801
    %v1803 = vpop.f32.mrb[0].mxu0
    %1804 = vmatprep.mubr.bf16.mxu0 %v1661
    %1805 = vmatmul.mubr.bf16.gmra.mrb[0].mxu0 %v1660
    %v1806 = vpop.f32.mrb[0].mxu0
    %v1807 = vadd.f32 %v1471, %v1806
    %v1808 = vpop.f32.mrb[0].mxu0
    %v1809 = vpop.f32.mrb[0].mxu0
    %v1810 = vadd.f32 %v1476, %v1809
    %v1811 = vpop.f32.mrb[0].mxu0
    %1812 = vmatprep.mubr.bf16.mxu0 %v1663
    %1813 = vmatmul.mubr.bf16.gmra.mrb[0].mxu0 %v1662
    %v1814 = vpop.f32.mrb[0].mxu0
    %v1815 = vadd.f32 %v1481, %v1814
    %v1816 = vpop.f32.mrb[0].mxu0
    %v1817 = vpop.f32.mrb[0].mxu0
    %v1818 = vadd.f32 %v1486, %v1817
    %v1819 = vpop.f32.mrb[0].mxu0
    %1820 = vmatprep.mubr.bf16.mxu0 %v1665
    %1821 = vmatmul.mubr.bf16.gmra.mrb[0].mxu0 %v1664
    %v1822 = vpop.f32.mrb[0].mxu0
    %v1823 = vadd.f32 %v1491, %v1822
    %v1824 = vpop.f32.mrb[0].mxu0
    %v1825 = vpop.f32.mrb[0].mxu0
    %v1826 = vadd.f32 %v1496, %v1825
    %v1827 = vpop.f32.mrb[0].mxu0
    %1828 = vmatprep.mubr.bf16.mxu0 %v1667
    %1829 = vmatmul.mubr.bf16.gmra.mrb[0].mxu0 %v1666
    %v1830 = vpop.f32.mrb[0].mxu0
    %v1831 = vadd.f32 %v1501, %v1830
    %v1832 = vpop.f32.mrb[0].mxu0
    %v1833 = vpop.f32.mrb[0].mxu0
    %v1834 = vadd.f32 %v1506, %v1833
    %v1835 = vpop.f32.mrb[0].mxu0
    %1836 = vmatprep.mubr.bf16.mxu0 %v1669
    %1837 = vmatmul.mubr.bf16.gmra.mrb[0].mxu0 %v1668
    %v1838 = vpop.f32.mrb[0].mxu0
    %v1839 = vadd.f32 %v1511, %v1838
    %v1840 = vpop.f32.mrb[0].mxu0
    %v1841 = vpop.f32.mrb[0].mxu0
    %v1842 = vadd.f32 %v1516, %v1841
    %v1843 = vpop.f32.mrb[0].mxu0
    %1844 = vmatprep.mubr.bf16.mxu0 %v1671
    %1845 = vmatmul.mubr.bf16.gmra.mrb[0].mxu0 %v1670
    %v1846 = vpop.f32.mrb[0].mxu0
    %v1847 = vadd.f32 %v1521, %v1846
    %v1848 = vpop.f32.mrb[0].mxu0
    %v1849 = vpop.f32.mrb[0].mxu0
    %v1850 = vadd.f32 %v1526, %v1849
    %v1851 = vpop.f32.mrb[0].mxu0
    %1852 = vmatprep.mubr.bf16.mxu0 %v1673
    %1853 = vmatmul.mubr.bf16.gmra.mrb[0].mxu0 %v1672
    %v1854 = vpop.f32.mrb[0].mxu0
    %v1855 = vadd.f32 %v1531, %v1854
    %v1856 = vpop.f32.mrb[0].mxu0
    %v1857 = vpop.f32.mrb[0].mxu0
    %v1858 = vadd.f32 %v1536, %v1857
    %v1859 = vpop.f32.mrb[0].mxu0
    %1860 = vmatprep.mubr.bf16.mxu0 %v1675
    %1861 = vmatmul.mubr.bf16.gmra.mrb[0].mxu0 %v1674
    %v1862 = vpop.f32.mrb[0].mxu0
    %v1863 = vadd.f32 %v1541, %v1862
    %v1864 = vpop.f32.mrb[0].mxu0
    %v1865 = vpop.f32.mrb[0].mxu0
    %v1866 = vadd.f32 %v1546, %v1865
    %v1867 = vpop.f32.mrb[0].mxu0
    %1868 = vdwg.mxu0
    %v1869 = vtanh.pop %v1743
    %v1870 = vtanh.pop %v1746
    %v1871 = vtanh.pop %v1751
    %v1872 = vtanh.pop %v1754
    %v1873 = vtanh.pop %v1759
    %v1874 = vtanh.pop %v1762
    %v1875 = vtanh.pop %v1767
    %v1876 = vtanh.pop %v1770
    %v1877 = vtanh.pop %v1775
    %v1878 = vtanh.pop %v1778
    %v1879 = vtanh.pop %v1783
    %v1880 = vtanh.pop %v1786
    %v1881 = vtanh.pop %v1791
    %v1882 = vtanh.pop %v1794
    %v1883 = vtanh.pop %v1799
    %v1884 = vtanh.pop %v1802
    %v1885 = vtanh.pop %v1807
    %v1886 = vtanh.pop %v1810
    %v1887 = vtanh.pop %v1815
    %v1888 = vtanh.pop %v1818
    %v1889 = vtanh.pop %v1823
    %v1890 = vtanh.pop %v1826
    %v1891 = vtanh.pop %v1831
    %v1892 = vtanh.pop %v1834
    %v1893 = vtanh.pop %v1839
    %v1894 = vtanh.pop %v1842
    %v1895 = vtanh.pop %v1847
    %v1896 = vtanh.pop %v1850
    %v1897 = vtanh.pop %v1855
    %v1898 = vtanh.pop %v1858
    %v1899 = vtanh.pop %v1863
    %v1900 = vtanh.pop %v1866
    %v1901 = vld [vmem:[%s7] sm:$0xff]
    %v1902 = vpack.c.bf16 %v1870, %v1869
    %v1903 = vpack.c.bf16 %v1872, %v1871
    %v1904 = vpack.c.bf16 %v1874, %v1873
    %v1905 = vpack.c.bf16 %v1876, %v1875
    %v1906 = vpack.c.bf16 %v1878, %v1877
    %v1907 = vpack.c.bf16 %v1880, %v1879
    %v1908 = vpack.c.bf16 %v1882, %v1881
    %v1909 = vpack.c.bf16 %v1884, %v1883
    %v1910 = vpack.c.bf16 %v1886, %v1885
    %v1911 = vpack.c.bf16 %v1888, %v1887
    %v1912 = vpack.c.bf16 %v1890, %v1889
    %v1913 = vpack.c.bf16 %v1892, %v1891
    %v1914 = vpack.c.bf16 %v1894, %v1893
    %v1915 = vpack.c.bf16 %v1896, %v1895
    %v1916 = vpack.c.bf16 %v1898, %v1897
    %v1917 = vpack.c.bf16 %v1900, %v1899
    %v1918 = vld [vmem:[%s8] sm:$0xff]
    %1920 = vset.pattern.permute.xlu0 0
    %1921 = vperm.xlu0 %1920, %v1918
    %v1922 = vpop.permute.xlu0 %1921
    %v1925 = vunpack.c.l.b16 %v1901
    %v1926 = vunpack.c.h.b16 %v1901
    %v1927 = vpack.c.b16 %v1925, %v1925
    %v1928 = vpack.c.b16 %v1926, %v1926
    %1931 = vmatprep.subr.bf16.mxu0 0
    %1932 = vmatpush1.bf16.msra.mxu0 %v1902
    %1933 = vmatprep.subr.bf16.mxu0 0
    %1934 = vmatpush1.bf16.msra.mxu0 %v1903
    %1935 = vmatprep.subr.bf16.mxu0 0
    %1936 = vmatpush1.bf16.msra.mxu0 %v1904
    %1937 = vmatprep.subr.bf16.mxu0 0
    %1938 = vmatpush1.bf16.msra.mxu0 %v1905
    %1939 = vmatprep.subr.bf16.mxu0 0
    %1940 = vmatpush1.bf16.msra.mxu0 %v1906
    %1941 = vmatprep.subr.bf16.mxu0 0
    %1942 = vmatpush1.bf16.msra.mxu0 %v1907
    %1943 = vmatprep.subr.bf16.mxu0 0
    %1944 = vmatpush1.bf16.msra.mxu0 %v1908
    %1945 = vmatprep.subr.bf16.mxu0 0
    %1946 = vmatpush1.bf16.msra.mxu0 %v1909
    %1947 = vmatprep.subr.bf16.mxu0 0
    %1948 = vmatpush1.bf16.msra.mxu0 %v1910
    %1949 = vmatprep.subr.bf16.mxu0 0
    %1950 = vmatpush1.bf16.msra.mxu0 %v1911
    %1951 = vmatprep.subr.bf16.mxu0 0
    %1952 = vmatpush1.bf16.msra.mxu0 %v1912
    %1953 = vmatprep.subr.bf16.mxu0 0
    %1954 = vmatpush1.bf16.msra.mxu0 %v1913
    %1955 = vmatprep.subr.bf16.mxu0 0
    %1956 = vmatpush1.bf16.msra.mxu0 %v1914
    %1957 = vmatprep.subr.bf16.mxu0 0
    %1958 = vmatpush1.bf16.msra.mxu0 %v1915
    %1959 = vmatprep.subr.bf16.mxu0 0
    %1960 = vmatpush1.bf16.msra.mxu0 %v1916
    %1961 = vmatprep.subr.bf16.mxu0 0
    %1962 = vmatpush1.bf16.msra.mxu0 %v1917
    %1963 = vmatprep.mubr.bf16.mxu0 %v1928
    %1964 = vmatmul.mubr.bf16.gmra.mrb[0].mxu0 %v1927
    %v1965 = vpop.f32.mrb[0].mxu0
    %v1966 = vadd.f32 %v1922, %v1965
    %v1967 = vpop.f32.mrb[0].mxu0
    %v1968 = vpop.f32.mrb[0].mxu0
    %v1969 = vpop.f32.mrb[0].mxu0
    %1970 = vdwg.mxu0
    %1971 = vst [vmem:[#allocation2] sm:$0xff] %v1966
    // Predicated region
    $region38: #{tpu_custom_call.1} parent=1 // pred_check
      _
    $region39: #{tpu_custom_call.1} parent=1 // pred_check_branch
      %1973 = sbr.rel (0) target = $region41
    $region40: #{tpu_custom_call.1} parent=1 // pred_region
      %s1975 = ssub.s32 128, 128
      %1976 = vsyncadd [#allocation3], %s1975
      %s1978 = sshll.u32 [#allocation2], 4
      %s1979 = int_to_ptr.vmem [resolvable:$true] %s1978
      %1981 = dma.vmem_to_hbm [thread:$0]  %s1979, 128, %s9, [#allocation3]
    $region41: #{tpu_custom_call.1} parent=1 // pred_fallthru
      _
    // Predicated region
    $region42: #{tpu_custom_call.1} parent=1 // pred_check
      _
    $region43: #{tpu_custom_call.1} parent=1 // pred_check_branch
      %1983 = sbr.rel (0) target = $region45
    $region44: #{tpu_custom_call.1} parent=1 // pred_region
      %1984 = dma.done [#allocation3], 128
    $region45: #{tpu_custom_call.1} parent=1 // pred_fallthru
      _
    %1985 = vsyncpa [#allocation3], 1

</llo_original>
